<compile_context>
chip_gen: v7x
topology: tpu7x:2x2x1
jax: 0.10.0
libtpu: 0.0.40
codegen_flags: <defaults>
</compile_context>

<pallas_src>
import math

import jax
import jax.numpy as jnp
import numpy as np
from jax.experimental import pallas as pl
from jax.experimental.pallas import tpu as pltpu

NEG_SLOPE = 0.01   # F.leaky_relu default
LN_EPS = 1e-5      # F.layer_norm default


# ----------------------------------------------------------------------------
# Fused kernel: the whole ResNet block for one batch element per grid step.
# ----------------------------------------------------------------------------
def _make_kernel(H, W):
    HW = H * W

    def kernel(x_ref, tapm_ref, w1s_ref, b1s_ref, w2_ref, b2_ref, w3_ref,
               b3_ref, o_ref, out1_ref):
        c_out = w3_ref.shape[0]

        def lrelu(v):
            return jnp.where(v >= 0, v, NEG_SLOPE * v)

        def layer_norm(v):
            # F.layer_norm over all of (C, H, W) for this sample, no affine.
            # Single pass: mean and E[x^2] together, f32 accumulation.
            n = v.shape[0] * v.shape[1]
            s = jnp.sum(v)
            s2 = jnp.sum(v * v)
            mean = s / n
            var = s2 / n - mean * mean
            return (v - mean) * jax.lax.rsqrt(var + LN_EPS)

        def conv3x3(act, w_ref_, b_ref_):
            """act: (Cin, H*W) f32 -> (Cout, H*W) f32 via one dense-K matmul."""
            mm_dtype = w_ref_.dtype
            taps = []
            for dh in range(3):
                for dw in range(3):
                    k = dh * 3 + dw
                    s = (dh - 1) * W + (dw - 1)          # flat spatial offset
                    t = act if s == 0 else pltpu.roll(act, shift=(-s) % HW,
                                                      axis=1)
                    if k != 4:                            # center tap: no border
                        t = t * tapm_ref[k]               # (1, HW) 0/1 mask
                    taps.append(t.astype(mm_dtype))       # cast at MXU boundary
            patch = jnp.concatenate(taps, axis=0)         # (9*Cin, HW), dense K
            return (jnp.dot(w_ref_[...], patch,
                            preferred_element_type=jnp.float32) + b_ref_[...])

        x = x_ref[0]                                      # (cin_pad, HW) f32

        # conv1 + skip_conv read the same input: one patch, one fused matmul.
        y = conv3x3(x, w1s_ref, b1s_ref)                  # (2*c_out, HW)
        out1_ref[...] = y[c_out:, :]                      # park skip branch
        h = lrelu(y[:c_out, :])                           # conv1 + leaky_relu
        # TODO(synk): Dropout2d is identity (inference mode; torch RNG not reproducible)
        h = layer_norm(h)                                 # LN over (C, H, W)
        h = lrelu(conv3x3(h, w2_ref, b2_ref))
        h = layer_norm(h)
        h = lrelu(conv3x3(h, w3_ref, b3_ref))
        o_ref[0] = lrelu(h + out1_ref[...])               # residual + lrelu

    return kernel


# ----------------------------------------------------------------------------
# Wrapper: weight packing + single pallas_call.  Everything stays NCHW.
# ----------------------------------------------------------------------------
def _pack_weight(w, dtype, cin_pad=None):
    """HWIO (3,3,Cin,Cout) -> (Cout, 9*cin_pad); K row k*cin_pad + c holds tap
    k = dh*3+dw, input channel c (zero rows for padded channels)."""
    kh, kw, cin, cout = w.shape
    cin_pad = cin if cin_pad is None else cin_pad
    if cin_pad > cin:
        w = jnp.pad(w, ((0, 0), (0, 0), (0, cin_pad - cin), (0, 0)))
    return w.reshape(kh * kw * cin_pad, cout).T.astype(dtype)


def _tap_masks(H, W):
    """(9, 1, H*W) float32 {0,1} validity masks for the 9 taps of a SAME conv."""
    hh = np.arange(H).reshape(H, 1)
    ww = np.arange(W).reshape(1, W)
    m = np.zeros((9, 1, H * W), np.float32)
    for dh in range(3):
        for dw in range(3):
            ok = np.ones((H, W), bool)
            if dh == 0:
                ok = ok & (hh >= 1)
            if dh == 2:
                ok = ok & (hh <= H - 2)
            if dw == 0:
                ok = ok & (ww >= 1)
            if dw == 2:
                ok = ok & (ww <= W - 2)
            m[dh * 3 + dw, 0, :] = ok.reshape(-1)
    return jnp.asarray(m)


def resnet_forward(x_nchw, params, matmul_dtype=jnp.bfloat16):
    (w1, b1), (w2, b2), (w3, b3), (ws, bs) = params
    N, c_in, H, W = x_nchw.shape
    c_out = w1.shape[-1]
    c_mid = w2.shape[-1]
    HW = H * W

    # Pad the tiny input-channel dim so conv1's tap blocks stay tile aligned
    # (8 sublanes for f32, 16 for packed bf16).  conv2/conv3 channel counts
    # (32 / 16 by default) are already aligned and are packed with exact K.
    sub = 32 // jnp.dtype(matmul_dtype).itemsize          # 8 (f32) / 16 (bf16)
    cin_pad = ((c_in + sub - 1) // sub) * sub

    x_flat = x_nchw.reshape(N, c_in, HW)                   # pure reshape, no transpose
    x_flat = jnp.pad(x_flat, ((0, 0), (0, cin_pad - c_in), (0, 0)))

    # conv1 + skip_conv share their input -> one fused weight slab.
    w1s = jnp.concatenate(
        [_pack_weight(w1, matmul_dtype, cin_pad),
         _pack_weight(ws, matmul_dtype, cin_pad)], axis=0)  # (2*c_out, 9*cin_pad)
    b1s = jnp.concatenate([b1, bs]).reshape(2 * c_out, 1).astype(jnp.float32)
    w2p = _pack_weight(w2, matmul_dtype)                    # (c_mid, 9*c_out)
    w3p = _pack_weight(w3, matmul_dtype)                    # (c_out, 9*c_mid)
    b2r = b2.reshape(c_mid, 1).astype(jnp.float32)
    b3r = b3.reshape(c_out, 1).astype(jnp.float32)

    masks = _tap_masks(H, W)                                # (9, 1, HW) f32

    out = pl.pallas_call(
        _make_kernel(H, W),
        out_shape=jax.ShapeDtypeStruct((N, c_out, HW), jnp.float32),
        grid=(N,),
        in_specs=[
            pl.BlockSpec((1, cin_pad, HW), lambda n: (n, 0, 0)),
            pl.BlockSpec(masks.shape, lambda n: (0, 0, 0)),
            pl.BlockSpec(w1s.shape, lambda n: (0, 0)),
            pl.BlockSpec(b1s.shape, lambda n: (0, 0)),
            pl.BlockSpec(w2p.shape, lambda n: (0, 0)),
            pl.BlockSpec(b2r.shape, lambda n: (0, 0)),
            pl.BlockSpec(w3p.shape, lambda n: (0, 0)),
            pl.BlockSpec(b3r.shape, lambda n: (0, 0)),
        ],
        out_specs=pl.BlockSpec((1, c_out, HW), lambda n: (n, 0, 0)),
        scratch_shapes=[pltpu.VMEM((c_out, HW), jnp.float32)],  # parked skip branch
        compiler_params=pltpu.CompilerParams(
            dimension_semantics=("parallel",),
            vmem_limit_bytes=32 * 1024 * 1024),
    )(x_flat, masks, w1s, b1s, w2p, b2r, w3p, b3r)

    return out.reshape(N, c_out, H, W)                      # NCHW, no transpose


# ----------------------------------------------------------------------------
# Pure-JAX reference (numerical check).
# ----------------------------------------------------------------------------
def _conv_ref(x_nhwc, w, b):
    y = jax.lax.conv_general_dilated(
        x_nhwc, w, window_strides=(1, 1), padding="SAME",
        dimension_numbers=("NHWC", "HWIO", "NHWC"))
    return y + b


def reference_forward(x_nchw, params):
    (w1, b1), (w2, b2), (w3, b3), (ws, bs) = params
    x = jnp.transpose(x_nchw, (0, 2, 3, 1))
    lrelu = lambda v: jnp.where(v >= 0, v, NEG_SLOPE * v)

    def ln(v):
        mean = jnp.mean(v, axis=(1, 2, 3), keepdims=True)
        var = jnp.mean((v - mean) ** 2, axis=(1, 2, 3), keepdims=True)
        return (v - mean) * jax.lax.rsqrt(var + LN_EPS)

    out = lrelu(_conv_ref(x, w1, b1))
    out = ln(out)
    out = lrelu(_conv_ref(out, w2, b2))
    out = ln(out)
    out1 = _conv_ref(x, ws, bs)
    out = lrelu(_conv_ref(out, w3, b3))
    out = lrelu(out + out1)
    return jnp.transpose(out, (0, 3, 1, 2))


# ----------------------------------------------------------------------------
# Deterministic parameter init (PyTorch Conv2d default-style uniform bounds),
# weights in HWIO layout (3, 3, Cin, Cout).
# ----------------------------------------------------------------------------
def init_conv(key, cin, cout):
    k1, k2 = jax.random.split(key)
    bound = 1.0 / math.sqrt(cin * 3 * 3)
    w = jax.random.uniform(k1, (3, 3, cin, cout), jnp.float32, -bound, bound)
    b = jax.random.uniform(k2, (cout,), jnp.float32, -bound, bound)
    return w, b


if __name__ == "__main__":
    key = jax.random.PRNGKey(0)
    N, C_IN, H, W = 2, 3, 16, 16
    C_OUT = 32

    k1, k2, k3, k4, kx = jax.random.split(key, 5)
    params = (
        init_conv(k1, C_IN, C_OUT),           # conv1
        init_conv(k2, C_OUT, C_OUT // 2),     # conv2
        init_conv(k3, C_OUT // 2, C_OUT),     # conv3
        init_conv(k4, C_IN, C_OUT),           # skip_conv
    )
    x = jax.random.normal(kx, (N, C_IN, H, W), jnp.float32)

    y_ref = reference_forward(x, params)

    # 1) float32-matmul path: tight check that the dense-K packing, lane rolls
    #    and boundary masks are exactly right (expected error ~1e-6).
    y32 = jax.jit(lambda a, p: resnet_forward(a, p, matmul_dtype=jnp.float32))(
        x, params)
    jax.block_until_ready(y32)
    assert y32.shape == (N, C_OUT, H, W)
    err32 = float(jnp.max(jnp.abs(y32 - y_ref)))
    assert err32 < 1e-4, f"f32 path mismatch: {err32}"

    # 2) default bf16-matmul path (f32 accumulation): looser bound consistent
    #    with bf16 rounding through 3 convs + 2 LayerNorms (estimated max ~1e-2);
    #    the strict packing/indexing check is the f32 run above.
    ybf = jax.jit(resnet_forward)(x, params)
    jax.block_until_ready(ybf)
    assert ybf.shape == (N, C_OUT, H, W)
    errbf = float(jnp.max(jnp.abs(ybf - y_ref)))
    assert errbf < 4e-2, f"bf16 path mismatch: {errbf}"

    print("KERNEL_OK")
</pallas_src>

<mosaic_0001>
module attributes {stable_mosaic.version = 11 : i64} {
  func.func @kernel(%arg0: i32, %arg1: memref<1x8x256xf32, #tpu.memory_space<vmem>>, %arg2: memref<9x1x256xf32, #tpu.memory_space<vmem>>, %arg3: memref<64x72xf32, #tpu.memory_space<vmem>>, %arg4: memref<64x1xf32, #tpu.memory_space<vmem>>, %arg5: memref<16x288xf32, #tpu.memory_space<vmem>>, %arg6: memref<16x1xf32, #tpu.memory_space<vmem>>, %arg7: memref<32x144xf32, #tpu.memory_space<vmem>>, %arg8: memref<32x1xf32, #tpu.memory_space<vmem>>, %arg9: memref<1x32x256xf32, #tpu.memory_space<vmem>>, %arg10: memref<32x256xf32, #tpu.memory_space<vmem>>) attributes {dimension_semantics = [#tpu.dimension_semantics<parallel>], iteration_bounds = array<i64: 2>, scalar_prefetch = 0 : i64, scratch_operands = 1 : i64, tpu.core_type = #tpu.core_type<tc>, window_params = [{transform_indices = @transform_0, window_bounds = array<i64: 1, 8, 256>}, {pipeline_mode = #tpu.pipeline_mode<synchronous>, transform_indices = @transform_1, window_bounds = array<i64: 9, 1, 256>}, {pipeline_mode = #tpu.pipeline_mode<synchronous>, transform_indices = @transform_2, window_bounds = array<i64: 64, 72>}, {pipeline_mode = #tpu.pipeline_mode<synchronous>, transform_indices = @transform_3, window_bounds = array<i64: 64, 1>}, {pipeline_mode = #tpu.pipeline_mode<synchronous>, transform_indices = @transform_4, window_bounds = array<i64: 16, 288>}, {pipeline_mode = #tpu.pipeline_mode<synchronous>, transform_indices = @transform_5, window_bounds = array<i64: 16, 1>}, {pipeline_mode = #tpu.pipeline_mode<synchronous>, transform_indices = @transform_6, window_bounds = array<i64: 32, 144>}, {pipeline_mode = #tpu.pipeline_mode<synchronous>, transform_indices = @transform_7, window_bounds = array<i64: 32, 1>}, {transform_indices = @transform_8, window_bounds = array<i64: 1, 32, 256>}]} {
    %c0 = arith.constant 0 : index
    %c0_0 = arith.constant 0 : index
    %c0_1 = arith.constant 0 : index
    %0 = vector.load %arg1[%c0, %c0_0, %c0_1] : memref<1x8x256xf32, #tpu.memory_space<vmem>>, vector<1x8x256xf32>
    %1 = vector.shape_cast %0 : vector<1x8x256xf32> to vector<8x256xf32>
    %c17_i32 = arith.constant 17 : i32
    %2 = tpu.dynamic_rotate %1 by %c17_i32 dim 1 : vector<8x256xf32>, i32 -> vector<8x256xf32>
    %c0_2 = arith.constant 0 : index
    %c0_3 = arith.constant 0 : index
    %c0_4 = arith.constant 0 : index
    %3 = vector.load %arg2[%c0_2, %c0_3, %c0_4] : memref<9x1x256xf32, #tpu.memory_space<vmem>>, vector<1x1x256xf32>
    %4 = vector.shape_cast %3 : vector<1x1x256xf32> to vector<1x256xf32>
    %5 = vector.broadcast %4 : vector<1x256xf32> to vector<8x256xf32>
    %6 = arith.mulf %2, %5 : vector<8x256xf32>
    %c16_i32 = arith.constant 16 : i32
    %7 = tpu.dynamic_rotate %1 by %c16_i32 dim 1 : vector<8x256xf32>, i32 -> vector<8x256xf32>
    %c1 = arith.constant 1 : index
    %c0_5 = arith.constant 0 : index
    %c0_6 = arith.constant 0 : index
    %8 = vector.load %arg2[%c1, %c0_5, %c0_6] : memref<9x1x256xf32, #tpu.memory_space<vmem>>, vector<1x1x256xf32>
    %9 = vector.shape_cast %8 : vector<1x1x256xf32> to vector<1x256xf32>
    %10 = vector.broadcast %9 : vector<1x256xf32> to vector<8x256xf32>
    %11 = arith.mulf %7, %10 : vector<8x256xf32>
    %c15_i32 = arith.constant 15 : i32
    %12 = tpu.dynamic_rotate %1 by %c15_i32 dim 1 : vector<8x256xf32>, i32 -> vector<8x256xf32>
    %c2 = arith.constant 2 : index
    %c0_7 = arith.constant 0 : index
    %c0_8 = arith.constant 0 : index
    %13 = vector.load %arg2[%c2, %c0_7, %c0_8] : memref<9x1x256xf32, #tpu.memory_space<vmem>>, vector<1x1x256xf32>
    %14 = vector.shape_cast %13 : vector<1x1x256xf32> to vector<1x256xf32>
    %15 = vector.broadcast %14 : vector<1x256xf32> to vector<8x256xf32>
    %16 = arith.mulf %12, %15 : vector<8x256xf32>
    %c1_i32 = arith.constant 1 : i32
    %17 = tpu.dynamic_rotate %1 by %c1_i32 dim 1 : vector<8x256xf32>, i32 -> vector<8x256xf32>
    %c3 = arith.constant 3 : index
    %c0_9 = arith.constant 0 : index
    %c0_10 = arith.constant 0 : index
    %18 = vector.load %arg2[%c3, %c0_9, %c0_10] : memref<9x1x256xf32, #tpu.memory_space<vmem>>, vector<1x1x256xf32>
    %19 = vector.shape_cast %18 : vector<1x1x256xf32> to vector<1x256xf32>
    %20 = vector.broadcast %19 : vector<1x256xf32> to vector<8x256xf32>
    %21 = arith.mulf %17, %20 : vector<8x256xf32>
    %c255_i32 = arith.constant 255 : i32
    %22 = tpu.dynamic_rotate %1 by %c255_i32 dim 1 : vector<8x256xf32>, i32 -> vector<8x256xf32>
    %c5 = arith.constant 5 : index
    %c0_11 = arith.constant 0 : index
    %c0_12 = arith.constant 0 : index
    %23 = vector.load %arg2[%c5, %c0_11, %c0_12] : memref<9x1x256xf32, #tpu.memory_space<vmem>>, vector<1x1x256xf32>
    %24 = vector.shape_cast %23 : vector<1x1x256xf32> to vector<1x256xf32>
    %25 = vector.broadcast %24 : vector<1x256xf32> to vector<8x256xf32>
    %26 = arith.mulf %22, %25 : vector<8x256xf32>
    %c241_i32 = arith.constant 241 : i32
    %27 = tpu.dynamic_rotate %1 by %c241_i32 dim 1 : vector<8x256xf32>, i32 -> vector<8x256xf32>
    %c6 = arith.constant 6 : index
    %c0_13 = arith.constant 0 : index
    %c0_14 = arith.constant 0 : index
    %28 = vector.load %arg2[%c6, %c0_13, %c0_14] : memref<9x1x256xf32, #tpu.memory_space<vmem>>, vector<1x1x256xf32>
    %29 = vector.shape_cast %28 : vector<1x1x256xf32> to vector<1x256xf32>
    %30 = vector.broadcast %29 : vector<1x256xf32> to vector<8x256xf32>
    %31 = arith.mulf %27, %30 : vector<8x256xf32>
    %c240_i32 = arith.constant 240 : i32
    %32 = tpu.dynamic_rotate %1 by %c240_i32 dim 1 : vector<8x256xf32>, i32 -> vector<8x256xf32>
    %c7 = arith.constant 7 : index
    %c0_15 = arith.constant 0 : index
    %c0_16 = arith.constant 0 : index
    %33 = vector.load %arg2[%c7, %c0_15, %c0_16] : memref<9x1x256xf32, #tpu.memory_space<vmem>>, vector<1x1x256xf32>
    %34 = vector.shape_cast %33 : vector<1x1x256xf32> to vector<1x256xf32>
    %35 = vector.broadcast %34 : vector<1x256xf32> to vector<8x256xf32>
    %36 = arith.mulf %32, %35 : vector<8x256xf32>
    %c239_i32 = arith.constant 239 : i32
    %37 = tpu.dynamic_rotate %1 by %c239_i32 dim 1 : vector<8x256xf32>, i32 -> vector<8x256xf32>
    %c8 = arith.constant 8 : index
    %c0_17 = arith.constant 0 : index
    %c0_18 = arith.constant 0 : index
    %38 = vector.load %arg2[%c8, %c0_17, %c0_18] : memref<9x1x256xf32, #tpu.memory_space<vmem>>, vector<1x1x256xf32>
    %39 = vector.shape_cast %38 : vector<1x1x256xf32> to vector<1x256xf32>
    %40 = vector.broadcast %39 : vector<1x256xf32> to vector<8x256xf32>
    %41 = arith.mulf %37, %40 : vector<8x256xf32>
    %42 = tpu.concatenate %6, %11, %16, %21, %1, %26, %31, %36, %41 in 0 : vector<8x256xf32>, vector<8x256xf32>, vector<8x256xf32>, vector<8x256xf32>, vector<8x256xf32>, vector<8x256xf32>, vector<8x256xf32>, vector<8x256xf32>, vector<8x256xf32> -> vector<72x256xf32>
    %c0_19 = arith.constant 0 : index
    %c0_20 = arith.constant 0 : index
    %43 = vector.load %arg3[%c0_19, %c0_20] : memref<64x72xf32, #tpu.memory_space<vmem>>, vector<64x72xf32>
    %cst = arith.constant dense<0.000000e+00> : vector<64x256xf32>
    %44 = tpu.matmul %43, %42, %cst {dimension_numbers = #tpu.dot_dimension_numbers<[1], [0], [0], [1], [0, 0, 1, 1], [], []>} : vector<64x72xf32>, vector<72x256xf32>, vector<64x256xf32> -> vector<64x256xf32>
    %c0_21 = arith.constant 0 : index
    %c0_22 = arith.constant 0 : index
    %45 = vector.load %arg4[%c0_21, %c0_22] : memref<64x1xf32, #tpu.memory_space<vmem>>, vector<64x1xf32>
    %46 = vector.broadcast %45 : vector<64x1xf32> to vector<64x256xf32>
    %47 = arith.addf %44, %46 : vector<64x256xf32>
    %48 = vector.extract_strided_slice %47 {offsets = [32, 0], sizes = [32, 256], strides = [1, 1]} : vector<64x256xf32> to vector<32x256xf32>
    %c0_23 = arith.constant 0 : index
    %c0_24 = arith.constant 0 : index
    %49 = vector.load %arg10[%c0_23, %c0_24] : memref<32x256xf32, #tpu.memory_space<vmem>>, vector<32x256xf32>
    tpu.vector_store %arg10[%c0_23, %c0_24], %48 {strides = array<i32>} : memref<32x256xf32, #tpu.memory_space<vmem>>, vector<32x256xf32>,
    %50 = vector.extract_strided_slice %47 {offsets = [0, 0], sizes = [32, 256], strides = [1, 1]} : vector<64x256xf32> to vector<32x256xf32>
    %cst_25 = arith.constant 0.000000e+00 : f32
    %51 = vector.broadcast %cst_25 : f32 to vector<32x256xf32>
    %52 = arith.cmpf oge, %50, %51 : vector<32x256xf32>
    %cst_26 = arith.constant 0.00999999977 : f32
    %53 = vector.broadcast %cst_26 : f32 to vector<32x256xf32>
    %54 = arith.mulf %53, %50 : vector<32x256xf32>
    %55 = arith.select %52, %50, %54 : vector<32x256xi1>, vector<32x256xf32>
    %56 = vector.shape_cast %55 : vector<32x256xf32> to vector<1x32x256xf32>
    %cst_27 = arith.constant dense<0.000000e+00> : vector<1xf32>
    %57 = vector.multi_reduction <add>, %56, %cst_27 [1, 2] : vector<1x32x256xf32> to vector<1xf32>
    %58 = vector.shape_cast %57 : vector<1xf32> to vector<1x1x1xf32>
    %59 = vector.extract %58[0, 0, 0] : f32 from vector<1x1x1xf32>
    %60 = arith.mulf %55, %55 : vector<32x256xf32>
    %61 = vector.shape_cast %60 : vector<32x256xf32> to vector<1x32x256xf32>
    %cst_28 = arith.constant dense<0.000000e+00> : vector<1xf32>
    %62 = vector.multi_reduction <add>, %61, %cst_28 [1, 2] : vector<1x32x256xf32> to vector<1xf32>
    %63 = vector.shape_cast %62 : vector<1xf32> to vector<1x1x1xf32>
    %64 = vector.extract %63[0, 0, 0] : f32 from vector<1x1x1xf32>
    %cst_29 = arith.constant 8.192000e+03 : f32
    %65 = arith.divf %59, %cst_29 : f32
    %cst_30 = arith.constant 8.192000e+03 : f32
    %66 = arith.divf %64, %cst_30 : f32
    %67 = arith.mulf %65, %65 : f32
    %68 = arith.subf %66, %67 : f32
    %69 = vector.broadcast %65 : f32 to vector<32x256xf32>
    %70 = arith.subf %55, %69 : vector<32x256xf32>
    %cst_31 = arith.constant 9.99999974E-6 : f32
    %71 = arith.addf %68, %cst_31 : f32
    %72 = math.rsqrt %71 : f32
    %73 = vector.broadcast %72 : f32 to vector<32x256xf32>
    %74 = arith.mulf %70, %73 : vector<32x256xf32>
    %c17_i32_32 = arith.constant 17 : i32
    %75 = tpu.dynamic_rotate %74 by %c17_i32_32 dim 1 : vector<32x256xf32>, i32 -> vector<32x256xf32>
    %c0_33 = arith.constant 0 : index
    %c0_34 = arith.constant 0 : index
    %c0_35 = arith.constant 0 : index
    %76 = vector.load %arg2[%c0_33, %c0_34, %c0_35] : memref<9x1x256xf32, #tpu.memory_space<vmem>>, vector<1x1x256xf32>
    %77 = vector.shape_cast %76 : vector<1x1x256xf32> to vector<1x256xf32>
    %78 = vector.broadcast %77 : vector<1x256xf32> to vector<32x256xf32>
    %79 = arith.mulf %75, %78 : vector<32x256xf32>
    %c16_i32_36 = arith.constant 16 : i32
    %80 = tpu.dynamic_rotate %74 by %c16_i32_36 dim 1 : vector<32x256xf32>, i32 -> vector<32x256xf32>
    %c1_37 = arith.constant 1 : index
    %c0_38 = arith.constant 0 : index
    %c0_39 = arith.constant 0 : index
    %81 = vector.load %arg2[%c1_37, %c0_38, %c0_39] : memref<9x1x256xf32, #tpu.memory_space<vmem>>, vector<1x1x256xf32>
    %82 = vector.shape_cast %81 : vector<1x1x256xf32> to vector<1x256xf32>
    %83 = vector.broadcast %82 : vector<1x256xf32> to vector<32x256xf32>
    %84 = arith.mulf %80, %83 : vector<32x256xf32>
    %c15_i32_40 = arith.constant 15 : i32
    %85 = tpu.dynamic_rotate %74 by %c15_i32_40 dim 1 : vector<32x256xf32>, i32 -> vector<32x256xf32>
    %c2_41 = arith.constant 2 : index
    %c0_42 = arith.constant 0 : index
    %c0_43 = arith.constant 0 : index
    %86 = vector.load %arg2[%c2_41, %c0_42, %c0_43] : memref<9x1x256xf32, #tpu.memory_space<vmem>>, vector<1x1x256xf32>
    %87 = vector.shape_cast %86 : vector<1x1x256xf32> to vector<1x256xf32>
    %88 = vector.broadcast %87 : vector<1x256xf32> to vector<32x256xf32>
    %89 = arith.mulf %85, %88 : vector<32x256xf32>
    %c1_i32_44 = arith.constant 1 : i32
    %90 = tpu.dynamic_rotate %74 by %c1_i32_44 dim 1 : vector<32x256xf32>, i32 -> vector<32x256xf32>
    %c3_45 = arith.constant 3 : index
    %c0_46 = arith.constant 0 : index
    %c0_47 = arith.constant 0 : index
    %91 = vector.load %arg2[%c3_45, %c0_46, %c0_47] : memref<9x1x256xf32, #tpu.memory_space<vmem>>, vector<1x1x256xf32>
    %92 = vector.shape_cast %91 : vector<1x1x256xf32> to vector<1x256xf32>
    %93 = vector.broadcast %92 : vector<1x256xf32> to vector<32x256xf32>
    %94 = arith.mulf %90, %93 : vector<32x256xf32>
    %c255_i32_48 = arith.constant 255 : i32
    %95 = tpu.dynamic_rotate %74 by %c255_i32_48 dim 1 : vector<32x256xf32>, i32 -> vector<32x256xf32>
    %c5_49 = arith.constant 5 : index
    %c0_50 = arith.constant 0 : index
    %c0_51 = arith.constant 0 : index
    %96 = vector.load %arg2[%c5_49, %c0_50, %c0_51] : memref<9x1x256xf32, #tpu.memory_space<vmem>>, vector<1x1x256xf32>
    %97 = vector.shape_cast %96 : vector<1x1x256xf32> to vector<1x256xf32>
    %98 = vector.broadcast %97 : vector<1x256xf32> to vector<32x256xf32>
    %99 = arith.mulf %95, %98 : vector<32x256xf32>
    %c241_i32_52 = arith.constant 241 : i32
    %100 = tpu.dynamic_rotate %74 by %c241_i32_52 dim 1 : vector<32x256xf32>, i32 -> vector<32x256xf32>
    %c6_53 = arith.constant 6 : index
    %c0_54 = arith.constant 0 : index
    %c0_55 = arith.constant 0 : index
    %101 = vector.load %arg2[%c6_53, %c0_54, %c0_55] : memref<9x1x256xf32, #tpu.memory_space<vmem>>, vector<1x1x256xf32>
    %102 = vector.shape_cast %101 : vector<1x1x256xf32> to vector<1x256xf32>
    %103 = vector.broadcast %102 : vector<1x256xf32> to vector<32x256xf32>
    %104 = arith.mulf %100, %103 : vector<32x256xf32>
    %c240_i32_56 = arith.constant 240 : i32
    %105 = tpu.dynamic_rotate %74 by %c240_i32_56 dim 1 : vector<32x256xf32>, i32 -> vector<32x256xf32>
    %c7_57 = arith.constant 7 : index
    %c0_58 = arith.constant 0 : index
    %c0_59 = arith.constant 0 : index
    %106 = vector.load %arg2[%c7_57, %c0_58, %c0_59] : memref<9x1x256xf32, #tpu.memory_space<vmem>>, vector<1x1x256xf32>
    %107 = vector.shape_cast %106 : vector<1x1x256xf32> to vector<1x256xf32>
    %108 = vector.broadcast %107 : vector<1x256xf32> to vector<32x256xf32>
    %109 = arith.mulf %105, %108 : vector<32x256xf32>
    %c239_i32_60 = arith.constant 239 : i32
    %110 = tpu.dynamic_rotate %74 by %c239_i32_60 dim 1 : vector<32x256xf32>, i32 -> vector<32x256xf32>
    %c8_61 = arith.constant 8 : index
    %c0_62 = arith.constant 0 : index
    %c0_63 = arith.constant 0 : index
    %111 = vector.load %arg2[%c8_61, %c0_62, %c0_63] : memref<9x1x256xf32, #tpu.memory_space<vmem>>, vector<1x1x256xf32>
    %112 = vector.shape_cast %111 : vector<1x1x256xf32> to vector<1x256xf32>
    %113 = vector.broadcast %112 : vector<1x256xf32> to vector<32x256xf32>
    %114 = arith.mulf %110, %113 : vector<32x256xf32>
    %115 = tpu.concatenate %79, %84, %89, %94, %74, %99, %104, %109, %114 in 0 : vector<32x256xf32>, vector<32x256xf32>, vector<32x256xf32>, vector<32x256xf32>, vector<32x256xf32>, vector<32x256xf32>, vector<32x256xf32>, vector<32x256xf32>, vector<32x256xf32> -> vector<288x256xf32>
    %c0_64 = arith.constant 0 : index
    %c0_65 = arith.constant 0 : index
    %116 = vector.load %arg5[%c0_64, %c0_65] : memref<16x288xf32, #tpu.memory_space<vmem>>, vector<16x288xf32>
    %cst_66 = arith.constant dense<0.000000e+00> : vector<16x256xf32>
    %117 = tpu.matmul %116, %115, %cst_66 {dimension_numbers = #tpu.dot_dimension_numbers<[1], [0], [0], [1], [0, 0, 1, 1], [], []>} : vector<16x288xf32>, vector<288x256xf32>, vector<16x256xf32> -> vector<16x256xf32>
    %c0_67 = arith.constant 0 : index
    %c0_68 = arith.constant 0 : index
    %118 = vector.load %arg6[%c0_67, %c0_68] : memref<16x1xf32, #tpu.memory_space<vmem>>, vector<16x1xf32>
    %119 = vector.broadcast %118 : vector<16x1xf32> to vector<16x256xf32>
    %120 = arith.addf %117, %119 : vector<16x256xf32>
    %cst_69 = arith.constant 0.000000e+00 : f32
    %121 = vector.broadcast %cst_69 : f32 to vector<16x256xf32>
    %122 = arith.cmpf oge, %120, %121 : vector<16x256xf32>
    %cst_70 = arith.constant 0.00999999977 : f32
    %123 = vector.broadcast %cst_70 : f32 to vector<16x256xf32>
    %124 = arith.mulf %123, %120 : vector<16x256xf32>
    %125 = arith.select %122, %120, %124 : vector<16x256xi1>, vector<16x256xf32>
    %126 = vector.shape_cast %125 : vector<16x256xf32> to vector<1x16x256xf32>
    %cst_71 = arith.constant dense<0.000000e+00> : vector<1xf32>
    %127 = vector.multi_reduction <add>, %126, %cst_71 [1, 2] : vector<1x16x256xf32> to vector<1xf32>
    %128 = vector.shape_cast %127 : vector<1xf32> to vector<1x1x1xf32>
    %129 = vector.extract %128[0, 0, 0] : f32 from vector<1x1x1xf32>
    %130 = arith.mulf %125, %125 : vector<16x256xf32>
    %131 = vector.shape_cast %130 : vector<16x256xf32> to vector<1x16x256xf32>
    %cst_72 = arith.constant dense<0.000000e+00> : vector<1xf32>
    %132 = vector.multi_reduction <add>, %131, %cst_72 [1, 2] : vector<1x16x256xf32> to vector<1xf32>
    %133 = vector.shape_cast %132 : vector<1xf32> to vector<1x1x1xf32>
    %134 = vector.extract %133[0, 0, 0] : f32 from vector<1x1x1xf32>
    %cst_73 = arith.constant 4.096000e+03 : f32
    %135 = arith.divf %129, %cst_73 : f32
    %cst_74 = arith.constant 4.096000e+03 : f32
    %136 = arith.divf %134, %cst_74 : f32
    %137 = arith.mulf %135, %135 : f32
    %138 = arith.subf %136, %137 : f32
    %139 = vector.broadcast %135 : f32 to vector<16x256xf32>
    %140 = arith.subf %125, %139 : vector<16x256xf32>
    %cst_75 = arith.constant 9.99999974E-6 : f32
    %141 = arith.addf %138, %cst_75 : f32
    %142 = math.rsqrt %141 : f32
    %143 = vector.broadcast %142 : f32 to vector<16x256xf32>
    %144 = arith.mulf %140, %143 : vector<16x256xf32>
    %c17_i32_76 = arith.constant 17 : i32
    %145 = tpu.dynamic_rotate %144 by %c17_i32_76 dim 1 : vector<16x256xf32>, i32 -> vector<16x256xf32>
    %c0_77 = arith.constant 0 : index
    %c0_78 = arith.constant 0 : index
    %c0_79 = arith.constant 0 : index
    %146 = vector.load %arg2[%c0_77, %c0_78, %c0_79] : memref<9x1x256xf32, #tpu.memory_space<vmem>>, vector<1x1x256xf32>
    %147 = vector.shape_cast %146 : vector<1x1x256xf32> to vector<1x256xf32>
    %148 = vector.broadcast %147 : vector<1x256xf32> to vector<16x256xf32>
    %149 = arith.mulf %145, %148 : vector<16x256xf32>
    %c16_i32_80 = arith.constant 16 : i32
    %150 = tpu.dynamic_rotate %144 by %c16_i32_80 dim 1 : vector<16x256xf32>, i32 -> vector<16x256xf32>
    %c1_81 = arith.constant 1 : index
    %c0_82 = arith.constant 0 : index
    %c0_83 = arith.constant 0 : index
    %151 = vector.load %arg2[%c1_81, %c0_82, %c0_83] : memref<9x1x256xf32, #tpu.memory_space<vmem>>, vector<1x1x256xf32>
    %152 = vector.shape_cast %151 : vector<1x1x256xf32> to vector<1x256xf32>
    %153 = vector.broadcast %152 : vector<1x256xf32> to vector<16x256xf32>
    %154 = arith.mulf %150, %153 : vector<16x256xf32>
    %c15_i32_84 = arith.constant 15 : i32
    %155 = tpu.dynamic_rotate %144 by %c15_i32_84 dim 1 : vector<16x256xf32>, i32 -> vector<16x256xf32>
    %c2_85 = arith.constant 2 : index
    %c0_86 = arith.constant 0 : index
    %c0_87 = arith.constant 0 : index
    %156 = vector.load %arg2[%c2_85, %c0_86, %c0_87] : memref<9x1x256xf32, #tpu.memory_space<vmem>>, vector<1x1x256xf32>
    %157 = vector.shape_cast %156 : vector<1x1x256xf32> to vector<1x256xf32>
    %158 = vector.broadcast %157 : vector<1x256xf32> to vector<16x256xf32>
    %159 = arith.mulf %155, %158 : vector<16x256xf32>
    %c1_i32_88 = arith.constant 1 : i32
    %160 = tpu.dynamic_rotate %144 by %c1_i32_88 dim 1 : vector<16x256xf32>, i32 -> vector<16x256xf32>
    %c3_89 = arith.constant 3 : index
    %c0_90 = arith.constant 0 : index
    %c0_91 = arith.constant 0 : index
    %161 = vector.load %arg2[%c3_89, %c0_90, %c0_91] : memref<9x1x256xf32, #tpu.memory_space<vmem>>, vector<1x1x256xf32>
    %162 = vector.shape_cast %161 : vector<1x1x256xf32> to vector<1x256xf32>
    %163 = vector.broadcast %162 : vector<1x256xf32> to vector<16x256xf32>
    %164 = arith.mulf %160, %163 : vector<16x256xf32>
    %c255_i32_92 = arith.constant 255 : i32
    %165 = tpu.dynamic_rotate %144 by %c255_i32_92 dim 1 : vector<16x256xf32>, i32 -> vector<16x256xf32>
    %c5_93 = arith.constant 5 : index
    %c0_94 = arith.constant 0 : index
    %c0_95 = arith.constant 0 : index
    %166 = vector.load %arg2[%c5_93, %c0_94, %c0_95] : memref<9x1x256xf32, #tpu.memory_space<vmem>>, vector<1x1x256xf32>
    %167 = vector.shape_cast %166 : vector<1x1x256xf32> to vector<1x256xf32>
    %168 = vector.broadcast %167 : vector<1x256xf32> to vector<16x256xf32>
    %169 = arith.mulf %165, %168 : vector<16x256xf32>
    %c241_i32_96 = arith.constant 241 : i32
    %170 = tpu.dynamic_rotate %144 by %c241_i32_96 dim 1 : vector<16x256xf32>, i32 -> vector<16x256xf32>
    %c6_97 = arith.constant 6 : index
    %c0_98 = arith.constant 0 : index
    %c0_99 = arith.constant 0 : index
    %171 = vector.load %arg2[%c6_97, %c0_98, %c0_99] : memref<9x1x256xf32, #tpu.memory_space<vmem>>, vector<1x1x256xf32>
    %172 = vector.shape_cast %171 : vector<1x1x256xf32> to vector<1x256xf32>
    %173 = vector.broadcast %172 : vector<1x256xf32> to vector<16x256xf32>
    %174 = arith.mulf %170, %173 : vector<16x256xf32>
    %c240_i32_100 = arith.constant 240 : i32
    %175 = tpu.dynamic_rotate %144 by %c240_i32_100 dim 1 : vector<16x256xf32>, i32 -> vector<16x256xf32>
    %c7_101 = arith.constant 7 : index
    %c0_102 = arith.constant 0 : index
    %c0_103 = arith.constant 0 : index
    %176 = vector.load %arg2[%c7_101, %c0_102, %c0_103] : memref<9x1x256xf32, #tpu.memory_space<vmem>>, vector<1x1x256xf32>
    %177 = vector.shape_cast %176 : vector<1x1x256xf32> to vector<1x256xf32>
    %178 = vector.broadcast %177 : vector<1x256xf32> to vector<16x256xf32>
    %179 = arith.mulf %175, %178 : vector<16x256xf32>
    %c239_i32_104 = arith.constant 239 : i32
    %180 = tpu.dynamic_rotate %144 by %c239_i32_104 dim 1 : vector<16x256xf32>, i32 -> vector<16x256xf32>
    %c8_105 = arith.constant 8 : index
    %c0_106 = arith.constant 0 : index
    %c0_107 = arith.constant 0 : index
    %181 = vector.load %arg2[%c8_105, %c0_106, %c0_107] : memref<9x1x256xf32, #tpu.memory_space<vmem>>, vector<1x1x256xf32>
    %182 = vector.shape_cast %181 : vector<1x1x256xf32> to vector<1x256xf32>
    %183 = vector.broadcast %182 : vector<1x256xf32> to vector<16x256xf32>
    %184 = arith.mulf %180, %183 : vector<16x256xf32>
    %185 = tpu.concatenate %149, %154, %159, %164, %144, %169, %174, %179, %184 in 0 : vector<16x256xf32>, vector<16x256xf32>, vector<16x256xf32>, vector<16x256xf32>, vector<16x256xf32>, vector<16x256xf32>, vector<16x256xf32>, vector<16x256xf32>, vector<16x256xf32> -> vector<144x256xf32>
    %c0_108 = arith.constant 0 : index
    %c0_109 = arith.constant 0 : index
    %186 = vector.load %arg7[%c0_108, %c0_109] : memref<32x144xf32, #tpu.memory_space<vmem>>, vector<32x144xf32>
    %cst_110 = arith.constant dense<0.000000e+00> : vector<32x256xf32>
    %187 = tpu.matmul %186, %185, %cst_110 {dimension_numbers = #tpu.dot_dimension_numbers<[1], [0], [0], [1], [0, 0, 1, 1], [], []>} : vector<32x144xf32>, vector<144x256xf32>, vector<32x256xf32> -> vector<32x256xf32>
    %c0_111 = arith.constant 0 : index
    %c0_112 = arith.constant 0 : index
    %188 = vector.load %arg8[%c0_111, %c0_112] : memref<32x1xf32, #tpu.memory_space<vmem>>, vector<32x1xf32>
    %189 = vector.broadcast %188 : vector<32x1xf32> to vector<32x256xf32>
    %190 = arith.addf %187, %189 : vector<32x256xf32>
    %cst_113 = arith.constant 0.000000e+00 : f32
    %191 = vector.broadcast %cst_113 : f32 to vector<32x256xf32>
    %192 = arith.cmpf oge, %190, %191 : vector<32x256xf32>
    %cst_114 = arith.constant 0.00999999977 : f32
    %193 = vector.broadcast %cst_114 : f32 to vector<32x256xf32>
    %194 = arith.mulf %193, %190 : vector<32x256xf32>
    %195 = arith.select %192, %190, %194 : vector<32x256xi1>, vector<32x256xf32>
    %c0_115 = arith.constant 0 : index
    %c0_116 = arith.constant 0 : index
    %196 = vector.load %arg10[%c0_115, %c0_116] : memref<32x256xf32, #tpu.memory_space<vmem>>, vector<32x256xf32>
    %197 = arith.addf %195, %196 : vector<32x256xf32>
    %cst_117 = arith.constant 0.000000e+00 : f32
    %198 = vector.broadcast %cst_117 : f32 to vector<32x256xf32>
    %199 = arith.cmpf oge, %197, %198 : vector<32x256xf32>
    %cst_118 = arith.constant 0.00999999977 : f32
    %200 = vector.broadcast %cst_118 : f32 to vector<32x256xf32>
    %201 = arith.mulf %200, %197 : vector<32x256xf32>
    %202 = arith.select %199, %197, %201 : vector<32x256xi1>, vector<32x256xf32>
    %c0_119 = arith.constant 0 : index
    %c0_120 = arith.constant 0 : index
    %c0_121 = arith.constant 0 : index
    %203 = vector.load %arg9[%c0_119, %c0_120, %c0_121] : memref<1x32x256xf32, #tpu.memory_space<vmem>>, vector<1x32x256xf32>
    %204 = vector.shape_cast %203 : vector<1x32x256xf32> to vector<32x256xf32>
    %205 = vector.shape_cast %202 : vector<32x256xf32> to vector<1x32x256xf32>
    tpu.vector_store %arg9[%c0_119, %c0_120, %c0_121], %205 {strides = array<i32>} : memref<1x32x256xf32, #tpu.memory_space<vmem>>, vector<1x32x256xf32>,
    return
  }
  func.func @transform_0(%arg0: i32) -> (i32, i32, i32) {
    %c0_i32 = arith.constant 0 : i32
    %c0_i32_0 = arith.constant 0 : i32
    %c0_i32_1 = arith.constant 0 : i32
    return %arg0, %c0_i32, %c0_i32_0 : i32, i32, i32
  }
  func.func @transform_1(%arg0: i32) -> (i32, i32, i32) {
    %c0_i32 = arith.constant 0 : i32
    %c0_i32_0 = arith.constant 0 : i32
    %c0_i32_1 = arith.constant 0 : i32
    %c0_i32_2 = arith.constant 0 : i32
    return %c0_i32, %c0_i32_0, %c0_i32_1 : i32, i32, i32
  }
  func.func @transform_2(%arg0: i32) -> (i32, i32) {
    %c0_i32 = arith.constant 0 : i32
    %c0_i32_0 = arith.constant 0 : i32
    %c0_i32_1 = arith.constant 0 : i32
    return %c0_i32, %c0_i32_0 : i32, i32
  }
  func.func @transform_3(%arg0: i32) -> (i32, i32) {
    %c0_i32 = arith.constant 0 : i32
    %c0_i32_0 = arith.constant 0 : i32
    %c0_i32_1 = arith.constant 0 : i32
    return %c0_i32, %c0_i32_0 : i32, i32
  }
  func.func @transform_4(%arg0: i32) -> (i32, i32) {
    %c0_i32 = arith.constant 0 : i32
    %c0_i32_0 = arith.constant 0 : i32
    %c0_i32_1 = arith.constant 0 : i32
    return %c0_i32, %c0_i32_0 : i32, i32
  }
  func.func @transform_5(%arg0: i32) -> (i32, i32) {
    %c0_i32 = arith.constant 0 : i32
    %c0_i32_0 = arith.constant 0 : i32
    %c0_i32_1 = arith.constant 0 : i32
    return %c0_i32, %c0_i32_0 : i32, i32
  }
  func.func @transform_6(%arg0: i32) -> (i32, i32) {
    %c0_i32 = arith.constant 0 : i32
    %c0_i32_0 = arith.constant 0 : i32
    %c0_i32_1 = arith.constant 0 : i32
    return %c0_i32, %c0_i32_0 : i32, i32
  }
  func.func @transform_7(%arg0: i32) -> (i32, i32) {
    %c0_i32 = arith.constant 0 : i32
    %c0_i32_0 = arith.constant 0 : i32
    %c0_i32_1 = arith.constant 0 : i32
    return %c0_i32, %c0_i32_0 : i32, i32
  }
  func.func @transform_8(%arg0: i32) -> (i32, i32, i32) {
    %c0_i32 = arith.constant 0 : i32
    %c0_i32_0 = arith.constant 0 : i32
    %c0_i32_1 = arith.constant 0 : i32
    return %arg0, %c0_i32, %c0_i32_0 : i32, i32, i32
  }
}

</mosaic_0001>

<llo_original>
// kernel: _lambda_.1
$region0: #{_lambda_.1}
  #allocation0 [shape = 'u32[]', space=smem, size = 0x4, offset = 0x4, fixed_abs, tag = 'smem constant byte address 0x4 - core index']
  #allocation1 [shape = 'u32[144,128]{1,0:T(1,128)}', space=vmem, size = 0x12000, scoped, tag = 'internal scratch']
  #allocation2 [shape = 'f32[32,256]{1,0:T(8,128)}', space=vmem, size = 0x8000, scoped, tag = 'scratch operand']
  %s0 = inlined_call_operand.vmem [shape: f32[2,8,256], index: 0, kind: input, shape index: {}]
  %s1 = inlined_call_operand.vmem [shape: f32[9,1,256], index: 1, kind: input, shape index: {}]
  %s2 = inlined_call_operand.vmem [shape: f32[64,72], index: 2, kind: input, shape index: {}]
  %s3 = inlined_call_operand.vmem [shape: f32[64,1], index: 3, kind: input, shape index: {}]
  %s4 = inlined_call_operand.vmem [shape: f32[16,288], index: 4, kind: input, shape index: {}]
  %s5 = inlined_call_operand.vmem [shape: f32[16,1], index: 5, kind: input, shape index: {}]
  %s6 = inlined_call_operand.vmem [shape: f32[32,144], index: 6, kind: input, shape index: {}]
  %s7 = inlined_call_operand.vmem [shape: f32[32,1], index: 7, kind: input, shape index: {}]
  %s8 = inlined_call_operand.vmem [shape: f32[2,32,256], index: 8, kind: output, shape index: {}]
  %s9 = sld [smem:[#allocation0]]
  $region65: #{_lambda_.1} parent=0
    _
  %s11 = ssub.s32 1, %s9
  %s12 = scalar_select 0, %s11, %s9
  loop: start=0, step=1, limit=4
  $region2: #{_lambda_.1} parent=0 // loop_pre_header
    _
  $region3: #{_lambda_.1} parent=0 // loop_header
    %s14 = sphi 0, %s18
    %p15 = scmp.ge.s32.totalorder %s14, 4
    %s24 = sphi 0, %s26
    %s27 = sphi 0, %s24
    %s28 = sphi 0, %s27
    %s44 = sphi 0, %s28
    %s48 = sphi 0, %s48
    %s50 = sphi 0, %s48
    %s51 = sphi 0, %s50
    %s65 = sphi 0, %s51
    %s69 = sphi 0, %s69
    %s71 = sphi 0, %s69
    %s72 = sphi 0, %s71
    %s86 = sphi 0, %s72
    %s90 = sphi 0, %s90
    %s92 = sphi 0, %s90
    %s93 = sphi 0, %s92
    %s107 = sphi 0, %s93
    %s111 = sphi 0, %s111
    %s113 = sphi 0, %s111
    %s114 = sphi 0, %s113
    %s128 = sphi 0, %s114
    %s132 = sphi 0, %s132
    %s134 = sphi 0, %s132
    %s135 = sphi 0, %s134
    %s149 = sphi 0, %s135
    %s153 = sphi 0, %s153
    %s155 = sphi 0, %s153
    %s156 = sphi 0, %s155
    %s170 = sphi 0, %s156
    %s174 = sphi 0, %s174
    %s176 = sphi 0, %s174
    %s177 = sphi 0, %s176
    %s191 = sphi 0, %s177
    %s197 = sphi 0, %s199
    %s200 = sphi 0, %s197
    %s201 = sphi 0, %s200
    %s217 = sphi 0, %s201
  $region4: #{_lambda_.1} parent=0 // loop_header_branch
    %17 = sbr.rel (%p15) target = $region8
  $region5: #{_lambda_.1} parent=0 // loop_body
    %s19 = ssub.s32 %s14, 1
    %s20 = ssub.s32 %s14, 2
    %s21 = sadd.s32 %s14, 1
    %s22 = ssub.s32 %s14, %s21
    %p23 = scmp.eq.s32.totalorder %s22, 0
    %s25 = sadd.s32 %s24, 1
    %s26 = scalar_select %p23, %s24, %s25
    %p29 = pneg %p23
    %p30 = scmp.eq.s32.totalorder %s14, 1
    %p31 = por %p29, %p30
    %p32 = scmp.ne.s32.totalorder %s24, %s27
    %p33 = scmp.eq.s32.totalorder %s14, 0
    %p34 = por %p32, %p33
    %p35 = scmp.ne.s32.totalorder %s24, %s27
    %p36 = scmp.eq.s32.totalorder %s19, 1
    %p37 = por %p35, %p36
    %p38 = scmp.ne.s32.totalorder %s27, %s28
    %p39 = scmp.eq.s32.totalorder %s19, 0
    %p40 = por %p38, %p39
    %p41 = scmp.ne.s32.totalorder %s27, %s28
    %p42 = scmp.eq.s32.totalorder %s20, 1
    %p43 = por %p41, %p42
    %p45 = scmp.ne.s32.totalorder %s28, %s44
    %p46 = scmp.eq.s32.totalorder %s20, 0
    %p47 = por %p45, %p46
    %s49 = sadd.s32 %s48, 1
    %p52 = scmp.eq.s32.totalorder %s14, 1
    %p53 = scmp.ne.s32.totalorder %s48, %s50
    %p54 = scmp.eq.s32.totalorder %s14, 0
    %p55 = por %p53, %p54
    %p56 = scmp.ne.s32.totalorder %s48, %s50
    %p57 = scmp.eq.s32.totalorder %s19, 1
    %p58 = por %p56, %p57
    %p59 = scmp.ne.s32.totalorder %s50, %s51
    %p60 = scmp.eq.s32.totalorder %s19, 0
    %p61 = por %p59, %p60
    %p62 = scmp.ne.s32.totalorder %s50, %s51
    %p63 = scmp.eq.s32.totalorder %s20, 1
    %p64 = por %p62, %p63
    %p66 = scmp.ne.s32.totalorder %s51, %s65
    %p67 = scmp.eq.s32.totalorder %s20, 0
    %p68 = por %p66, %p67
    %s70 = sadd.s32 %s69, 1
    %p73 = scmp.eq.s32.totalorder %s14, 1
    %p74 = scmp.ne.s32.totalorder %s69, %s71
    %p75 = scmp.eq.s32.totalorder %s14, 0
    %p76 = por %p74, %p75
    %p77 = scmp.ne.s32.totalorder %s69, %s71
    %p78 = scmp.eq.s32.totalorder %s19, 1
    %p79 = por %p77, %p78
    %p80 = scmp.ne.s32.totalorder %s71, %s72
    %p81 = scmp.eq.s32.totalorder %s19, 0
    %p82 = por %p80, %p81
    %p83 = scmp.ne.s32.totalorder %s71, %s72
    %p84 = scmp.eq.s32.totalorder %s20, 1
    %p85 = por %p83, %p84
    %p87 = scmp.ne.s32.totalorder %s72, %s86
    %p88 = scmp.eq.s32.totalorder %s20, 0
    %p89 = por %p87, %p88
    %s91 = sadd.s32 %s90, 1
    %p94 = scmp.eq.s32.totalorder %s14, 1
    %p95 = scmp.ne.s32.totalorder %s90, %s92
    %p96 = scmp.eq.s32.totalorder %s14, 0
    %p97 = por %p95, %p96
    %p98 = scmp.ne.s32.totalorder %s90, %s92
    %p99 = scmp.eq.s32.totalorder %s19, 1
    %p100 = por %p98, %p99
    %p101 = scmp.ne.s32.totalorder %s92, %s93
    %p102 = scmp.eq.s32.totalorder %s19, 0
    %p103 = por %p101, %p102
    %p104 = scmp.ne.s32.totalorder %s92, %s93
    %p105 = scmp.eq.s32.totalorder %s20, 1
    %p106 = por %p104, %p105
    %p108 = scmp.ne.s32.totalorder %s93, %s107
    %p109 = scmp.eq.s32.totalorder %s20, 0
    %p110 = por %p108, %p109
    %s112 = sadd.s32 %s111, 1
    %p115 = scmp.eq.s32.totalorder %s14, 1
    %p116 = scmp.ne.s32.totalorder %s111, %s113
    %p117 = scmp.eq.s32.totalorder %s14, 0
    %p118 = por %p116, %p117
    %p119 = scmp.ne.s32.totalorder %s111, %s113
    %p120 = scmp.eq.s32.totalorder %s19, 1
    %p121 = por %p119, %p120
    %p122 = scmp.ne.s32.totalorder %s113, %s114
    %p123 = scmp.eq.s32.totalorder %s19, 0
    %p124 = por %p122, %p123
    %p125 = scmp.ne.s32.totalorder %s113, %s114
    %p126 = scmp.eq.s32.totalorder %s20, 1
    %p127 = por %p125, %p126
    %p129 = scmp.ne.s32.totalorder %s114, %s128
    %p130 = scmp.eq.s32.totalorder %s20, 0
    %p131 = por %p129, %p130
    %s133 = sadd.s32 %s132, 1
    %p136 = scmp.eq.s32.totalorder %s14, 1
    %p137 = scmp.ne.s32.totalorder %s132, %s134
    %p138 = scmp.eq.s32.totalorder %s14, 0
    %p139 = por %p137, %p138
    %p140 = scmp.ne.s32.totalorder %s132, %s134
    %p141 = scmp.eq.s32.totalorder %s19, 1
    %p142 = por %p140, %p141
    %p143 = scmp.ne.s32.totalorder %s134, %s135
    %p144 = scmp.eq.s32.totalorder %s19, 0
    %p145 = por %p143, %p144
    %p146 = scmp.ne.s32.totalorder %s134, %s135
    %p147 = scmp.eq.s32.totalorder %s20, 1
    %p148 = por %p146, %p147
    %p150 = scmp.ne.s32.totalorder %s135, %s149
    %p151 = scmp.eq.s32.totalorder %s20, 0
    %p152 = por %p150, %p151
    %s154 = sadd.s32 %s153, 1
    %p157 = scmp.eq.s32.totalorder %s14, 1
    %p158 = scmp.ne.s32.totalorder %s153, %s155
    %p159 = scmp.eq.s32.totalorder %s14, 0
    %p160 = por %p158, %p159
    %p161 = scmp.ne.s32.totalorder %s153, %s155
    %p162 = scmp.eq.s32.totalorder %s19, 1
    %p163 = por %p161, %p162
    %p164 = scmp.ne.s32.totalorder %s155, %s156
    %p165 = scmp.eq.s32.totalorder %s19, 0
    %p166 = por %p164, %p165
    %p167 = scmp.ne.s32.totalorder %s155, %s156
    %p168 = scmp.eq.s32.totalorder %s20, 1
    %p169 = por %p167, %p168
    %p171 = scmp.ne.s32.totalorder %s156, %s170
    %p172 = scmp.eq.s32.totalorder %s20, 0
    %p173 = por %p171, %p172
    %s175 = sadd.s32 %s174, 1
    %p178 = scmp.eq.s32.totalorder %s14, 1
    %p179 = scmp.ne.s32.totalorder %s174, %s176
    %p180 = scmp.eq.s32.totalorder %s14, 0
    %p181 = por %p179, %p180
    %p182 = scmp.ne.s32.totalorder %s174, %s176
    %p183 = scmp.eq.s32.totalorder %s19, 1
    %p184 = por %p182, %p183
    %p185 = scmp.ne.s32.totalorder %s176, %s177
    %p186 = scmp.eq.s32.totalorder %s19, 0
    %p187 = por %p185, %p186
    %p188 = scmp.ne.s32.totalorder %s176, %s177
    %p189 = scmp.eq.s32.totalorder %s20, 1
    %p190 = por %p188, %p189
    %p192 = scmp.ne.s32.totalorder %s177, %s191
    %p193 = scmp.eq.s32.totalorder %s20, 0
    %p194 = por %p192, %p193
    %s195 = ssub.s32 %s14, %s21
    %p196 = scmp.eq.s32.totalorder %s195, 0
    %s198 = sadd.s32 %s197, 1
    %s199 = scalar_select %p196, %s197, %s198
    %p202 = pneg %p196
    %p203 = scmp.eq.s32.totalorder %s14, 1
    %p204 = por %p202, %p203
    %p205 = scmp.ne.s32.totalorder %s197, %s200
    %p206 = scmp.eq.s32.totalorder %s14, 0
    %p207 = por %p205, %p206
    %p208 = scmp.ne.s32.totalorder %s197, %s200
    %p209 = scmp.eq.s32.totalorder %s19, 1
    %p210 = por %p208, %p209
    %p211 = scmp.ne.s32.totalorder %s200, %s201
    %p212 = scmp.eq.s32.totalorder %s19, 0
    %p213 = por %p211, %p212
    %p214 = scmp.ne.s32.totalorder %s200, %s201
    %p215 = scmp.eq.s32.totalorder %s20, 1
    %p216 = por %p214, %p215
    %p218 = scmp.ne.s32.totalorder %s201, %s217
    %p219 = scmp.eq.s32.totalorder %s20, 0
    %p220 = por %p218, %p219
    %p221 = scmp.le.s32.totalorder 1, %s14
    %p222 = scmp.lt.s32.totalorder %s14, 3
    %p223 = pnand %p221, %p222
    %p224 = pneg %p223
    // Predicated region
    $region9: #{_lambda_.1} parent=5 // pred_check
      _
    $region10: #{_lambda_.1} parent=5 // pred_check_branch
      %226 = sbr.rel (%p223) target = $region12
    $region11: #{_lambda_.1} parent=5 // pred_region
      %s227 = ssub.s32 %s14, 1
      // Predicated region
      $region13: #{_lambda_.1} parent=11 // pred_check
        %p228 = pneg %p61
      $region14: #{_lambda_.1} parent=11 // pred_check_branch
        %230 = sbr.rel (%p228) target = $region16
      $region15: #{_lambda_.1} parent=11 // pred_region
        _
      $region16: #{_lambda_.1} parent=11 // pred_fallthru
        _
      // Predicated region
      $region17: #{_lambda_.1} parent=11 // pred_check
        %p231 = pneg %p82
      $region18: #{_lambda_.1} parent=11 // pred_check_branch
        %233 = sbr.rel (%p231) target = $region20
      $region19: #{_lambda_.1} parent=11 // pred_region
        _
      $region20: #{_lambda_.1} parent=11 // pred_fallthru
        _
      // Predicated region
      $region21: #{_lambda_.1} parent=11 // pred_check
        %p234 = pneg %p103
      $region22: #{_lambda_.1} parent=11 // pred_check_branch
        %236 = sbr.rel (%p234) target = $region24
      $region23: #{_lambda_.1} parent=11 // pred_region
        _
      $region24: #{_lambda_.1} parent=11 // pred_fallthru
        _
      // Predicated region
      $region25: #{_lambda_.1} parent=11 // pred_check
        %p237 = pneg %p124
      $region26: #{_lambda_.1} parent=11 // pred_check_branch
        %239 = sbr.rel (%p237) target = $region28
      $region27: #{_lambda_.1} parent=11 // pred_region
        _
      $region28: #{_lambda_.1} parent=11 // pred_fallthru
        _
      // Predicated region
      $region29: #{_lambda_.1} parent=11 // pred_check
        %p240 = pneg %p145
      $region30: #{_lambda_.1} parent=11 // pred_check_branch
        %242 = sbr.rel (%p240) target = $region32
      $region31: #{_lambda_.1} parent=11 // pred_region
        _
      $region32: #{_lambda_.1} parent=11 // pred_fallthru
        _
      // Predicated region
      $region33: #{_lambda_.1} parent=11 // pred_check
        %p243 = pneg %p166
      $region34: #{_lambda_.1} parent=11 // pred_check_branch
        %245 = sbr.rel (%p243) target = $region36
      $region35: #{_lambda_.1} parent=11 // pred_region
        _
      $region36: #{_lambda_.1} parent=11 // pred_fallthru
        _
      // Predicated region
      $region37: #{_lambda_.1} parent=11 // pred_check
        %p246 = pneg %p187
      $region38: #{_lambda_.1} parent=11 // pred_check_branch
        %248 = sbr.rel (%p246) target = $region40
      $region39: #{_lambda_.1} parent=11 // pred_region
        _
      $region40: #{_lambda_.1} parent=11 // pred_fallthru
        _
    $region12: #{_lambda_.1} parent=5 // pred_fallthru
      _
    %p249 = scmp.lt.s32.totalorder %s14, 2
    // Predicated region
    $region41: #{_lambda_.1} parent=5 // pred_check
      %p250 = pneg %p249
    $region42: #{_lambda_.1} parent=5 // pred_check_branch
      %252 = sbr.rel (%p250) target = $region44
    $region43: #{_lambda_.1} parent=5 // pred_region
      // Predicated region
      $region45: #{_lambda_.1} parent=43 // pred_check
        %p253 = pneg %p34
      $region46: #{_lambda_.1} parent=43 // pred_check_branch
        %255 = sbr.rel (%p253) target = $region48
      $region47: #{_lambda_.1} parent=43 // pred_region
        %p256 = scmp.lt.s32.totalorder %s14, 1
        %s257 = scalar_select %p256, %s14, 1
        %s258 = smul.addr %s257, 2
        %s259 = smul.addr %s258, 8
        %s260 = scalar_lea.vmem %s0, %s259
      $region48: #{_lambda_.1} parent=43 // pred_fallthru
        _
    $region44: #{_lambda_.1} parent=5 // pred_fallthru
      _
    %p261 = scmp.le.s32.totalorder 1, %s14
    %p262 = scmp.lt.s32.totalorder %s14, 3
    %p263 = pnand %p261, %p262
    %p264 = pneg %p263
    // Predicated region
    $region49: #{_lambda_.1} parent=5 // pred_check
      _
    $region50: #{_lambda_.1} parent=5 // pred_check_branch
      %266 = sbr.rel (%p263) target = $region52
    $region51: #{_lambda_.1} parent=5 // pred_region
      %s267 = ssub.s32 %s14, 1
      %p268 = scmp.lt.s32.totalorder %s19, 1
      %s269 = scalar_select %p268, %s19, 1
      %s270 = smul.addr %s269, 2
      %s271 = smul.addr %s270, 8
      %s272 = scalar_lea.vmem %s0, %s271
      %p273 = pneg %p40
      %p274 = pneg %p37
      %p275 = pneg %p61
      %p276 = pneg %p58
      %p277 = pneg %p82
      %p278 = pneg %p79
      %p279 = pneg %p103
      %p280 = pneg %p100
      %p281 = pneg %p124
      %p282 = pneg %p121
      %p283 = pneg %p145
      %p284 = pneg %p142
      %p285 = pneg %p166
      %p286 = pneg %p163
      %p287 = pneg %p187
      %p288 = pneg %p184
      %p289 = pneg %p213
      %p290 = pneg %p210
      %p291 = scmp.lt.s32.totalorder %s19, 1
      %s292 = scalar_select %p291, %s19, 1
      %s293 = smul.addr %s292, 8
      %s294 = smul.addr %s293, 8
      %s295 = scalar_lea.vmem %s8, %s294
      %p296 = scmp.lt.s32.totalorder %s19, 1
      %s297 = scalar_select %p296, %s19, 1
      %s298 = smul.addr %s297, 2
      %s299 = smul.addr %s298, 8
      %s300 = scalar_lea.vmem %s0, %s299
      %p301 = scmp.lt.s32.totalorder %s19, 1
      %s302 = scalar_select %p301, %s19, 1
      %s303 = smul.addr %s302, 8
      %s304 = smul.addr %s303, 8
      %s305 = scalar_lea.vmem %s8, %s304
      %v306 = vld [vmem:[%s300] sm:$0xff]
      %v307 = vld [vmem:[%s300 + $0x8] sm:$0xff]
      %308 = vrot.lane.b32.xlu0 %v306, 17
      %v309 = vpop.permute.xlu0 %308
      %310 = vrot.lane.b32.xlu0 %v307, 17
      %v311 = vpop.permute.xlu0 %310
      %v312 = vlaneseq
      %v313 = vand.u32 %v312, 127
      %vm314 = vcmp.lt.s32.totalorder %v313, 17
      %v315 = vsel %vm314, %v309, %v311
      %v316 = vsel %vm314, %v311, %v309
      %v317 = vld [vmem:[%s1] sm:$0x3]
      %v319 = vlaneseq
      %v320 = vshrl.u32 %v319, 7
      %v321 = vsub.s32 0, %v320
      %v322 = vrot.slane %v317, %v321
      %v323 = vlaneseq
      %v324 = vshrl.u32 %v323, 7
      %v325 = vsub.s32 1, %v324
      %v326 = vrot.slane %v317, %v325
      %v329 = vmul.f32 %v316, %v322
      %v330 = vmul.f32 %v315, %v326
      %331 = vrot.lane.b32.xlu0 %v306, 16
      %v332 = vpop.permute.xlu0 %331
      %333 = vrot.lane.b32.xlu0 %v307, 16
      %v334 = vpop.permute.xlu0 %333
      %vm335 = vcmp.lt.s32.totalorder %v313, 16
      %v336 = vsel %vm335, %v332, %v334
      %v337 = vsel %vm335, %v334, %v332
      %s338 = scalar_lea.vmem %s1, 2
      %v339 = vld [vmem:[%s338] sm:$0x3]
      %v341 = vlaneseq
      %v342 = vshrl.u32 %v341, 7
      %v343 = vsub.s32 0, %v342
      %v344 = vrot.slane %v339, %v343
      %v345 = vlaneseq
      %v346 = vshrl.u32 %v345, 7
      %v347 = vsub.s32 1, %v346
      %v348 = vrot.slane %v339, %v347
      %v351 = vmul.f32 %v337, %v344
      %v352 = vmul.f32 %v336, %v348
      %353 = vrot.lane.b32.xlu0 %v306, 15
      %v354 = vpop.permute.xlu0 %353
      %355 = vrot.lane.b32.xlu0 %v307, 15
      %v356 = vpop.permute.xlu0 %355
      %vm357 = vcmp.lt.s32.totalorder %v313, 15
      %v358 = vsel %vm357, %v354, %v356
      %v359 = vsel %vm357, %v356, %v354
      %s360 = scalar_lea.vmem %s1, 4
      %v361 = vld [vmem:[%s360] sm:$0x3]
      %v363 = vlaneseq
      %v364 = vshrl.u32 %v363, 7
      %v365 = vsub.s32 0, %v364
      %v366 = vrot.slane %v361, %v365
      %v367 = vlaneseq
      %v368 = vshrl.u32 %v367, 7
      %v369 = vsub.s32 1, %v368
      %v370 = vrot.slane %v361, %v369
      %v373 = vmul.f32 %v359, %v366
      %v374 = vmul.f32 %v358, %v370
      %375 = vrot.lane.b32.xlu0 %v306, 1
      %v376 = vpop.permute.xlu0 %375
      %377 = vrot.lane.b32.xlu0 %v307, 1
      %v378 = vpop.permute.xlu0 %377
      %vm379 = vcmp.lt.s32.totalorder %v313, 1
      %v380 = vsel %vm379, %v376, %v378
      %v381 = vsel %vm379, %v378, %v376
      %s382 = scalar_lea.vmem %s1, 6
      %v383 = vld [vmem:[%s382] sm:$0x3]
      %v385 = vlaneseq
      %v386 = vshrl.u32 %v385, 7
      %v387 = vsub.s32 0, %v386
      %v388 = vrot.slane %v383, %v387
      %v389 = vlaneseq
      %v390 = vshrl.u32 %v389, 7
      %v391 = vsub.s32 1, %v390
      %v392 = vrot.slane %v383, %v391
      %v395 = vmul.f32 %v381, %v388
      %v396 = vmul.f32 %v380, %v392
      %397 = vrot.lane.b32.xlu0 %v306, 127
      %v398 = vpop.permute.xlu0 %397
      %399 = vrot.lane.b32.xlu0 %v307, 127
      %v400 = vpop.permute.xlu0 %399
      %vm401 = vcmp.lt.s32.totalorder %v313, 127
      %v402 = vsel %vm401, %v398, %v400
      %v403 = vsel %vm401, %v400, %v398
      %s404 = scalar_lea.vmem %s1, 10
      %v405 = vld [vmem:[%s404] sm:$0x3]
      %v407 = vlaneseq
      %v408 = vshrl.u32 %v407, 7
      %v409 = vsub.s32 0, %v408
      %v410 = vrot.slane %v405, %v409
      %v411 = vlaneseq
      %v412 = vshrl.u32 %v411, 7
      %v413 = vsub.s32 1, %v412
      %v414 = vrot.slane %v405, %v413
      %v417 = vmul.f32 %v402, %v410
      %v418 = vmul.f32 %v403, %v414
      %419 = vrot.lane.b32.xlu0 %v306, 113
      %v420 = vpop.permute.xlu0 %419
      %421 = vrot.lane.b32.xlu0 %v307, 113
      %v422 = vpop.permute.xlu0 %421
      %vm423 = vcmp.lt.s32.totalorder %v313, 113
      %v424 = vsel %vm423, %v420, %v422
      %v425 = vsel %vm423, %v422, %v420
      %s426 = scalar_lea.vmem %s1, 12
      %v427 = vld [vmem:[%s426] sm:$0x3]
      %v429 = vlaneseq
      %v430 = vshrl.u32 %v429, 7
      %v431 = vsub.s32 0, %v430
      %v432 = vrot.slane %v427, %v431
      %v433 = vlaneseq
      %v434 = vshrl.u32 %v433, 7
      %v435 = vsub.s32 1, %v434
      %v436 = vrot.slane %v427, %v435
      %v439 = vmul.f32 %v424, %v432
      %v440 = vmul.f32 %v425, %v436
      %441 = vrot.lane.b32.xlu0 %v306, 112
      %v442 = vpop.permute.xlu0 %441
      %443 = vrot.lane.b32.xlu0 %v307, 112
      %v444 = vpop.permute.xlu0 %443
      %vm445 = vcmp.lt.s32.totalorder %v313, 112
      %v446 = vsel %vm445, %v442, %v444
      %v447 = vsel %vm445, %v444, %v442
      %s448 = scalar_lea.vmem %s1, 14
      %v449 = vld [vmem:[%s448] sm:$0x3]
      %v451 = vlaneseq
      %v452 = vshrl.u32 %v451, 7
      %v453 = vsub.s32 0, %v452
      %v454 = vrot.slane %v449, %v453
      %v455 = vlaneseq
      %v456 = vshrl.u32 %v455, 7
      %v457 = vsub.s32 1, %v456
      %v458 = vrot.slane %v449, %v457
      %v461 = vmul.f32 %v446, %v454
      %v462 = vmul.f32 %v447, %v458
      %463 = vrot.lane.b32.xlu0 %v306, 111
      %v464 = vpop.permute.xlu0 %463
      %465 = vrot.lane.b32.xlu0 %v307, 111
      %v466 = vpop.permute.xlu0 %465
      %vm467 = vcmp.lt.s32.totalorder %v313, 111
      %v468 = vsel %vm467, %v464, %v466
      %v469 = vsel %vm467, %v466, %v464
      %s470 = scalar_lea.vmem %s1, 16
      %v471 = vld [vmem:[%s470] sm:$0x3]
      %v473 = vlaneseq
      %v474 = vshrl.u32 %v473, 7
      %v475 = vsub.s32 0, %v474
      %v476 = vrot.slane %v471, %v475
      %v477 = vlaneseq
      %v478 = vshrl.u32 %v477, 7
      %v479 = vsub.s32 1, %v478
      %v480 = vrot.slane %v471, %v479
      %v483 = vmul.f32 %v468, %v476
      %v484 = vmul.f32 %v469, %v480
      %v485 = vld [vmem:[%s2] sm:$0xff]
      %v486 = vld [vmem:[%s2 + $0x8] sm:$0xff]
      %v487 = vld [vmem:[%s2 + $0x10] sm:$0xff]
      %v488 = vld [vmem:[%s2 + $0x18] sm:$0xff]
      %v489 = vld [vmem:[%s2 + $0x20] sm:$0xff]
      %v490 = vld [vmem:[%s2 + $0x28] sm:$0xff]
      %v491 = vld [vmem:[%s2 + $0x30] sm:$0xff]
      %v492 = vld [vmem:[%s2 + $0x38] sm:$0xff]
      %v493 = vld [vmem:[%s3] sm:$0xff]
      %v494 = vld [vmem:[%s3 + $0x8] sm:$0xff]
      %v495 = vld [vmem:[%s3 + $0x10] sm:$0xff]
      %v496 = vld [vmem:[%s3 + $0x18] sm:$0xff]
      %v497 = vld [vmem:[%s3 + $0x20] sm:$0xff]
      %v498 = vld [vmem:[%s3 + $0x28] sm:$0xff]
      %v499 = vld [vmem:[%s3 + $0x30] sm:$0xff]
      %v500 = vld [vmem:[%s3 + $0x38] sm:$0xff]
      %502 = vset.pattern.permute.xlu0 0
      %503 = vperm.xlu0 %502, %v493
      %v504 = vpop.permute.xlu0 %503
      %507 = vset.pattern.permute.xlu0 0
      %508 = vperm.xlu0 %507, %v494
      %v509 = vpop.permute.xlu0 %508
      %512 = vset.pattern.permute.xlu0 0
      %513 = vperm.xlu0 %512, %v495
      %v514 = vpop.permute.xlu0 %513
      %517 = vset.pattern.permute.xlu0 0
      %518 = vperm.xlu0 %517, %v496
      %v519 = vpop.permute.xlu0 %518
      %522 = vset.pattern.permute.xlu0 0
      %523 = vperm.xlu0 %522, %v497
      %v524 = vpop.permute.xlu0 %523
      %527 = vset.pattern.permute.xlu0 0
      %528 = vperm.xlu0 %527, %v498
      %v529 = vpop.permute.xlu0 %528
      %532 = vset.pattern.permute.xlu0 0
      %533 = vperm.xlu0 %532, %v499
      %v534 = vpop.permute.xlu0 %533
      %537 = vset.pattern.permute.xlu0 0
      %538 = vperm.xlu0 %537, %v500
      %v539 = vpop.permute.xlu0 %538
      %vm541 = vcmask 588800
      %v543 = vsel %vm541, %v485, 0
      %v546 = vsel %vm541, %v486, 0
      %v549 = vsel %vm541, %v487, 0
      %v552 = vsel %vm541, %v488, 0
      %v555 = vsel %vm541, %v489, 0
      %v558 = vsel %vm541, %v490, 0
      %v561 = vsel %vm541, %v491, 0
      %v564 = vsel %vm541, %v492, 0
      %566 = vmatprep.subr.mxu0 %v330
      %567 = vmatpush1.msra.mxu0 %v329
      %568 = vmatprep.subr.mxu0 %v352
      %569 = vmatpush1.msra.mxu0 %v351
      %570 = vmatprep.subr.mxu0 %v374
      %571 = vmatpush1.msra.mxu0 %v373
      %572 = vmatprep.subr.mxu0 %v396
      %573 = vmatpush1.msra.mxu0 %v395
      %574 = vmatprep.subr.mxu0 %v307
      %575 = vmatpush1.msra.mxu0 %v306
      %576 = vmatprep.subr.mxu0 %v418
      %577 = vmatpush1.msra.mxu0 %v417
      %578 = vmatprep.subr.mxu0 %v440
      %579 = vmatpush1.msra.mxu0 %v439
      %580 = vmatprep.subr.mxu0 %v462
      %581 = vmatpush1.msra.mxu0 %v461
      %582 = vmatprep.subr.mxu0 %v484
      %583 = vmatpush1.msra.mxu0 %v483
      %584 = vmatprep.subr.mxu0 0.0
      %585 = vmatpush1.msra.mxu0 0.0
      %586 = vmatprep.subr.mxu0 0.0
      %587 = vmatpush1.msra.mxu0 0.0
      %588 = vmatprep.subr.mxu0 0.0
      %589 = vmatpush1.msra.mxu0 0.0
      %590 = vmatprep.subr.mxu0 0.0
      %591 = vmatpush1.msra.mxu0 0.0
      %592 = vmatprep.subr.mxu0 0.0
      %593 = vmatpush1.msra.mxu0 0.0
      %594 = vmatprep.subr.mxu0 0.0
      %595 = vmatpush1.msra.mxu0 0.0
      %596 = vmatprep.subr.mxu0 0.0
      %597 = vmatpush1.msra.mxu0 0.0
      %598 = vmatprep.subr.mxu0 0.0
      %599 = vmatpush1.msra.mxu0 0.0
      %600 = vmatprep.subr.mxu0 0.0
      %601 = vmatpush1.msra.mxu0 0.0
      %602 = vmatprep.subr.mxu0 0.0
      %603 = vmatpush1.msra.mxu0 0.0
      %604 = vmatprep.subr.mxu0 0.0
      %605 = vmatpush1.msra.mxu0 0.0
      %606 = vmatprep.subr.mxu0 0.0
      %607 = vmatpush1.msra.mxu0 0.0
      %608 = vmatprep.subr.mxu0 0.0
      %609 = vmatpush1.msra.mxu0 0.0
      %610 = vmatprep.subr.mxu0 0.0
      %611 = vmatpush1.msra.mxu0 0.0
      %612 = vmatprep.subr.mxu0 0.0
      %613 = vmatpush1.msra.mxu0 0.0
      %614 = vmatprep.subr.mxu0 0.0
      %615 = vmatpush1.msra.mxu0 0.0
      %616 = vmatprep.subr.mxu0 0.0
      %617 = vmatpush1.msra.mxu0 0.0
      %618 = vmatprep.subr.mxu0 0.0
      %619 = vmatpush1.msra.mxu0 0.0
      %620 = vmatprep.subr.mxu0 0.0
      %621 = vmatpush1.msra.mxu0 0.0
      %622 = vmatprep.subr.mxu0 0.0
      %623 = vmatpush1.msra.mxu0 0.0
      %624 = vmatprep.subr.mxu0 0.0
      %625 = vmatpush1.msra.mxu0 0.0
      %626 = vmatprep.subr.mxu0 0.0
      %627 = vmatpush1.msra.mxu0 0.0
      %628 = vmatprep.subr.mxu0 0.0
      %629 = vmatpush1.msra.mxu0 0.0
      %630 = vmatprep.mubr.f32.mxu0 0.0
      %631 = vmatmul.mubr.f32.gmra.mrb[0].mxu0 %v543
      %v632 = vpop.f32.mrb[0].mxu0
      %v633 = vadd.f32 %v504, %v632
      %v634 = vpop.f32.mrb[0].mxu0
      %v635 = vadd.f32 %v504, %v634
      %636 = vmatprep.mubr.f32.mxu0 0.0
      %637 = vmatmul.mubr.f32.gmra.mrb[0].mxu0 %v546
      %v638 = vpop.f32.mrb[0].mxu0
      %v639 = vadd.f32 %v509, %v638
      %v640 = vpop.f32.mrb[0].mxu0
      %v641 = vadd.f32 %v509, %v640
      %642 = vmatprep.mubr.f32.mxu0 0.0
      %643 = vmatmul.mubr.f32.gmra.mrb[0].mxu0 %v549
      %v644 = vpop.f32.mrb[0].mxu0
      %v645 = vadd.f32 %v514, %v644
      %v646 = vpop.f32.mrb[0].mxu0
      %v647 = vadd.f32 %v514, %v646
      %648 = vmatprep.mubr.f32.mxu0 0.0
      %649 = vmatmul.mubr.f32.gmra.mrb[0].mxu0 %v552
      %v650 = vpop.f32.mrb[0].mxu0
      %v651 = vadd.f32 %v519, %v650
      %v652 = vpop.f32.mrb[0].mxu0
      %v653 = vadd.f32 %v519, %v652
      %654 = vmatprep.mubr.f32.mxu0 0.0
      %655 = vmatmul.mubr.f32.gmra.mrb[0].mxu0 %v555
      %v656 = vpop.f32.mrb[0].mxu0
      %v657 = vadd.f32 %v524, %v656
      %v658 = vpop.f32.mrb[0].mxu0
      %v659 = vadd.f32 %v524, %v658
      %660 = vmatprep.mubr.f32.mxu0 0.0
      %661 = vmatmul.mubr.f32.gmra.mrb[0].mxu0 %v558
      %v662 = vpop.f32.mrb[0].mxu0
      %v663 = vadd.f32 %v529, %v662
      %v664 = vpop.f32.mrb[0].mxu0
      %v665 = vadd.f32 %v529, %v664
      %666 = vmatprep.mubr.f32.mxu0 0.0
      %667 = vmatmul.mubr.f32.gmra.mrb[0].mxu0 %v561
      %v668 = vpop.f32.mrb[0].mxu0
      %v669 = vadd.f32 %v534, %v668
      %v670 = vpop.f32.mrb[0].mxu0
      %v671 = vadd.f32 %v534, %v670
      %672 = vmatprep.mubr.f32.mxu0 0.0
      %673 = vmatmul.mubr.f32.gmra.mrb[0].mxu0 %v564
      %v674 = vpop.f32.mrb[0].mxu0
      %v675 = vadd.f32 %v539, %v674
      %v676 = vpop.f32.mrb[0].mxu0
      %v677 = vadd.f32 %v539, %v676
      %678 = vdwg.mxu0
      %679 = vst [vmem:[#allocation2] sm:$0xff] %v657
      %680 = vst [vmem:[#allocation2 + $0x8] sm:$0xff] %v659
      %681 = vst [vmem:[#allocation2 + $0x10] sm:$0xff] %v663
      %682 = vst [vmem:[#allocation2 + $0x18] sm:$0xff] %v665
      %683 = vst [vmem:[#allocation2 + $0x20] sm:$0xff] %v669
      %684 = vst [vmem:[#allocation2 + $0x28] sm:$0xff] %v671
      %685 = vst [vmem:[#allocation2 + $0x30] sm:$0xff] %v675
      %686 = vst [vmem:[#allocation2 + $0x38] sm:$0xff] %v677
      %vm687 = vcmp.ge.f32.partialorder %v633, 0.0
      %vm688 = vcmp.ge.f32.partialorder %v635, 0.0
      %vm689 = vcmp.ge.f32.partialorder %v639, 0.0
      %vm690 = vcmp.ge.f32.partialorder %v641, 0.0
      %vm691 = vcmp.ge.f32.partialorder %v645, 0.0
      %vm692 = vcmp.ge.f32.partialorder %v647, 0.0
      %vm693 = vcmp.ge.f32.partialorder %v651, 0.0
      %vm694 = vcmp.ge.f32.partialorder %v653, 0.0
      %v695 = vmul.f32 %v633, 0.01
      %v696 = vmul.f32 %v635, 0.01
      %v697 = vmul.f32 %v639, 0.01
      %v698 = vmul.f32 %v641, 0.01
      %v699 = vmul.f32 %v645, 0.01
      %v700 = vmul.f32 %v647, 0.01
      %v701 = vmul.f32 %v651, 0.01
      %v702 = vmul.f32 %v653, 0.01
      %v703 = vsel %vm687, %v633, %v695
      %v704 = vsel %vm688, %v635, %v696
      %v705 = vsel %vm689, %v639, %v697
      %v706 = vsel %vm690, %v641, %v698
      %v707 = vsel %vm691, %v645, %v699
      %v708 = vsel %vm692, %v647, %v700
      %v709 = vsel %vm693, %v651, %v701
      %v710 = vsel %vm694, %v653, %v702
      %v711 = vadd.f32 %v703, %v704
      %v712 = vadd.f32 %v711, %v705
      %v713 = vadd.f32 %v712, %v706
      %v714 = vadd.f32 %v713, %v707
      %v715 = vadd.f32 %v714, %v708
      %v716 = vadd.f32 %v715, %v709
      %v717 = vadd.f32 %v716, %v710
      %718 = vadd.xlane.f32.xlu0 %v717
      %v719 = vpop.xlane.xlu0 %718
      %v720 = vrot.slane %v719, 4
      %v721 = vadd.f32 %v719, %v720
      %v722 = vrot.slane %v721, 2
      %v723 = vadd.f32 %v721, %v722
      %v724 = vrot.slane %v723, 1
      %v725 = vadd.f32 %v723, %v724
      %s726 = vtos %v725
      %v727 = vmul.f32 %v703, %v703
      %v728 = vmul.f32 %v704, %v704
      %v729 = vmul.f32 %v705, %v705
      %v730 = vmul.f32 %v706, %v706
      %v731 = vmul.f32 %v707, %v707
      %v732 = vmul.f32 %v708, %v708
      %v733 = vmul.f32 %v709, %v709
      %v734 = vmul.f32 %v710, %v710
      %v735 = vadd.f32 %v727, %v728
      %v736 = vadd.f32 %v735, %v729
      %v737 = vadd.f32 %v736, %v730
      %v738 = vadd.f32 %v737, %v731
      %v739 = vadd.f32 %v738, %v732
      %v740 = vadd.f32 %v739, %v733
      %v741 = vadd.f32 %v740, %v734
      %742 = vadd.xlane.f32.xlu0 %v741
      %v743 = vpop.xlane.xlu0 %742
      %v744 = vrot.slane %v743, 4
      %v745 = vadd.f32 %v743, %v744
      %v746 = vrot.slane %v745, 2
      %v747 = vadd.f32 %v745, %v746
      %v748 = vrot.slane %v747, 1
      %v749 = vadd.f32 %v747, %v748
      %s750 = vtos %v749
      %v751 = vrcp.pop 8192.0
      %s752 = vtos %v751
      %s753 = smul.f32 %s726, %s752
      %v754 = vrcp.pop 8192.0
      %s755 = vtos %v754
      %s756 = smul.f32 %s750, %s755
      %s757 = smul.f32 %s753, %s753
      %s758 = ssub.f32 %s756, %s757
      %v759 = vstv %s753
      %v760 = vsub.f32 %v703, %v759
      %v761 = vsub.f32 %v704, %v759
      %v762 = vsub.f32 %v705, %v759
      %v763 = vsub.f32 %v706, %v759
      %v764 = vsub.f32 %v707, %v759
      %v765 = vsub.f32 %v708, %v759
      %v766 = vsub.f32 %v709, %v759
      %v767 = vsub.f32 %v710, %v759
      %s768 = sadd.f32 %s758, 1e-05
      %v769 = vstv %s768
      %v770 = vrsqrt.pop %v769
      %s771 = vtos %v770
      %v772 = vstv %s771
      %v773 = vmul.f32 %v760, %v772
      %v774 = vmul.f32 %v761, %v772
      %v775 = vmul.f32 %v762, %v772
      %v776 = vmul.f32 %v763, %v772
      %v777 = vmul.f32 %v764, %v772
      %v778 = vmul.f32 %v765, %v772
      %v779 = vmul.f32 %v766, %v772
      %v780 = vmul.f32 %v767, %v772
      %781 = vrot.lane.b32.xlu0 %v773, 17
      %v782 = vpop.permute.xlu0 %781
      %783 = vrot.lane.b32.xlu0 %v775, 17
      %v784 = vpop.permute.xlu0 %783
      %785 = vrot.lane.b32.xlu0 %v777, 17
      %v786 = vpop.permute.xlu0 %785
      %787 = vrot.lane.b32.xlu0 %v779, 17
      %v788 = vpop.permute.xlu0 %787
      %789 = vrot.lane.b32.xlu0 %v774, 17
      %v790 = vpop.permute.xlu0 %789
      %791 = vrot.lane.b32.xlu0 %v776, 17
      %v792 = vpop.permute.xlu0 %791
      %793 = vrot.lane.b32.xlu0 %v778, 17
      %v794 = vpop.permute.xlu0 %793
      %795 = vrot.lane.b32.xlu0 %v780, 17
      %v796 = vpop.permute.xlu0 %795
      %v797 = vsel %vm314, %v782, %v790
      %v798 = vsel %vm314, %v784, %v792
      %v799 = vsel %vm314, %v786, %v794
      %v800 = vsel %vm314, %v788, %v796
      %v801 = vsel %vm314, %v790, %v782
      %v802 = vsel %vm314, %v792, %v784
      %v803 = vsel %vm314, %v794, %v786
      %v804 = vsel %vm314, %v796, %v788
      %v805 = vld [vmem:[%s1] sm:$0x3]
      %v807 = vlaneseq
      %v808 = vshrl.u32 %v807, 7
      %v809 = vsub.s32 0, %v808
      %v810 = vrot.slane %v805, %v809
      %v811 = vlaneseq
      %v812 = vshrl.u32 %v811, 7
      %v813 = vsub.s32 1, %v812
      %v814 = vrot.slane %v805, %v813
      %v817 = vmul.f32 %v801, %v810
      %v818 = vmul.f32 %v797, %v814
      %v819 = vmul.f32 %v802, %v810
      %v820 = vmul.f32 %v798, %v814
      %v821 = vmul.f32 %v803, %v810
      %v822 = vmul.f32 %v799, %v814
      %v823 = vmul.f32 %v804, %v810
      %v824 = vmul.f32 %v800, %v814
      %825 = vrot.lane.b32.xlu0 %v773, 16
      %v826 = vpop.permute.xlu0 %825
      %827 = vrot.lane.b32.xlu0 %v775, 16
      %v828 = vpop.permute.xlu0 %827
      %829 = vrot.lane.b32.xlu0 %v777, 16
      %v830 = vpop.permute.xlu0 %829
      %831 = vrot.lane.b32.xlu0 %v779, 16
      %v832 = vpop.permute.xlu0 %831
      %833 = vrot.lane.b32.xlu0 %v774, 16
      %v834 = vpop.permute.xlu0 %833
      %835 = vrot.lane.b32.xlu0 %v776, 16
      %v836 = vpop.permute.xlu0 %835
      %837 = vrot.lane.b32.xlu0 %v778, 16
      %v838 = vpop.permute.xlu0 %837
      %839 = vrot.lane.b32.xlu0 %v780, 16
      %v840 = vpop.permute.xlu0 %839
      %v841 = vsel %vm335, %v826, %v834
      %v842 = vsel %vm335, %v828, %v836
      %v843 = vsel %vm335, %v830, %v838
      %v844 = vsel %vm335, %v832, %v840
      %v845 = vsel %vm335, %v834, %v826
      %v846 = vsel %vm335, %v836, %v828
      %v847 = vsel %vm335, %v838, %v830
      %v848 = vsel %vm335, %v840, %v832
      %v849 = vld [vmem:[%s338] sm:$0x3]
      %v851 = vlaneseq
      %v852 = vshrl.u32 %v851, 7
      %v853 = vsub.s32 0, %v852
      %v854 = vrot.slane %v849, %v853
      %v855 = vlaneseq
      %v856 = vshrl.u32 %v855, 7
      %v857 = vsub.s32 1, %v856
      %v858 = vrot.slane %v849, %v857
      %v861 = vmul.f32 %v845, %v854
      %v862 = vmul.f32 %v841, %v858
      %v863 = vmul.f32 %v846, %v854
      %v864 = vmul.f32 %v842, %v858
      %v865 = vmul.f32 %v847, %v854
      %v866 = vmul.f32 %v843, %v858
      %v867 = vmul.f32 %v848, %v854
      %v868 = vmul.f32 %v844, %v858
      %869 = vrot.lane.b32.xlu0 %v773, 15
      %v870 = vpop.permute.xlu0 %869
      %871 = vrot.lane.b32.xlu0 %v775, 15
      %v872 = vpop.permute.xlu0 %871
      %873 = vrot.lane.b32.xlu0 %v777, 15
      %v874 = vpop.permute.xlu0 %873
      %875 = vrot.lane.b32.xlu0 %v779, 15
      %v876 = vpop.permute.xlu0 %875
      %877 = vrot.lane.b32.xlu0 %v774, 15
      %v878 = vpop.permute.xlu0 %877
      %879 = vrot.lane.b32.xlu0 %v776, 15
      %v880 = vpop.permute.xlu0 %879
      %881 = vrot.lane.b32.xlu0 %v778, 15
      %v882 = vpop.permute.xlu0 %881
      %883 = vrot.lane.b32.xlu0 %v780, 15
      %v884 = vpop.permute.xlu0 %883
      %v885 = vsel %vm357, %v870, %v878
      %v886 = vsel %vm357, %v872, %v880
      %v887 = vsel %vm357, %v874, %v882
      %v888 = vsel %vm357, %v876, %v884
      %v889 = vsel %vm357, %v878, %v870
      %v890 = vsel %vm357, %v880, %v872
      %v891 = vsel %vm357, %v882, %v874
      %v892 = vsel %vm357, %v884, %v876
      %v893 = vld [vmem:[%s360] sm:$0x3]
      %v895 = vlaneseq
      %v896 = vshrl.u32 %v895, 7
      %v897 = vsub.s32 0, %v896
      %v898 = vrot.slane %v893, %v897
      %v899 = vlaneseq
      %v900 = vshrl.u32 %v899, 7
      %v901 = vsub.s32 1, %v900
      %v902 = vrot.slane %v893, %v901
      %v905 = vmul.f32 %v889, %v898
      %v906 = vmul.f32 %v885, %v902
      %v907 = vmul.f32 %v890, %v898
      %v908 = vmul.f32 %v886, %v902
      %v909 = vmul.f32 %v891, %v898
      %v910 = vmul.f32 %v887, %v902
      %v911 = vmul.f32 %v892, %v898
      %v912 = vmul.f32 %v888, %v902
      %913 = vrot.lane.b32.xlu0 %v773, 1
      %v914 = vpop.permute.xlu0 %913
      %915 = vrot.lane.b32.xlu0 %v775, 1
      %v916 = vpop.permute.xlu0 %915
      %917 = vrot.lane.b32.xlu0 %v777, 1
      %v918 = vpop.permute.xlu0 %917
      %919 = vrot.lane.b32.xlu0 %v779, 1
      %v920 = vpop.permute.xlu0 %919
      %921 = vrot.lane.b32.xlu0 %v774, 1
      %v922 = vpop.permute.xlu0 %921
      %923 = vrot.lane.b32.xlu0 %v776, 1
      %v924 = vpop.permute.xlu0 %923
      %925 = vrot.lane.b32.xlu0 %v778, 1
      %v926 = vpop.permute.xlu0 %925
      %927 = vrot.lane.b32.xlu0 %v780, 1
      %v928 = vpop.permute.xlu0 %927
      %v929 = vsel %vm379, %v914, %v922
      %v930 = vsel %vm379, %v916, %v924
      %v931 = vsel %vm379, %v918, %v926
      %v932 = vsel %vm379, %v920, %v928
      %v933 = vsel %vm379, %v922, %v914
      %v934 = vsel %vm379, %v924, %v916
      %v935 = vsel %vm379, %v926, %v918
      %v936 = vsel %vm379, %v928, %v920
      %v937 = vld [vmem:[%s382] sm:$0x3]
      %v939 = vlaneseq
      %v940 = vshrl.u32 %v939, 7
      %v941 = vsub.s32 0, %v940
      %v942 = vrot.slane %v937, %v941
      %v943 = vlaneseq
      %v944 = vshrl.u32 %v943, 7
      %v945 = vsub.s32 1, %v944
      %v946 = vrot.slane %v937, %v945
      %v949 = vmul.f32 %v933, %v942
      %v950 = vmul.f32 %v929, %v946
      %v951 = vmul.f32 %v934, %v942
      %v952 = vmul.f32 %v930, %v946
      %v953 = vmul.f32 %v935, %v942
      %v954 = vmul.f32 %v931, %v946
      %v955 = vmul.f32 %v936, %v942
      %v956 = vmul.f32 %v932, %v946
      %957 = vrot.lane.b32.xlu0 %v773, 127
      %v958 = vpop.permute.xlu0 %957
      %959 = vrot.lane.b32.xlu0 %v775, 127
      %v960 = vpop.permute.xlu0 %959
      %961 = vrot.lane.b32.xlu0 %v777, 127
      %v962 = vpop.permute.xlu0 %961
      %963 = vrot.lane.b32.xlu0 %v779, 127
      %v964 = vpop.permute.xlu0 %963
      %965 = vrot.lane.b32.xlu0 %v774, 127
      %v966 = vpop.permute.xlu0 %965
      %967 = vrot.lane.b32.xlu0 %v776, 127
      %v968 = vpop.permute.xlu0 %967
      %969 = vrot.lane.b32.xlu0 %v778, 127
      %v970 = vpop.permute.xlu0 %969
      %971 = vrot.lane.b32.xlu0 %v780, 127
      %v972 = vpop.permute.xlu0 %971
      %v973 = vsel %vm401, %v958, %v966
      %v974 = vsel %vm401, %v960, %v968
      %v975 = vsel %vm401, %v962, %v970
      %v976 = vsel %vm401, %v964, %v972
      %v977 = vsel %vm401, %v966, %v958
      %v978 = vsel %vm401, %v968, %v960
      %v979 = vsel %vm401, %v970, %v962
      %v980 = vsel %vm401, %v972, %v964
      %v981 = vld [vmem:[%s404] sm:$0x3]
      %v983 = vlaneseq
      %v984 = vshrl.u32 %v983, 7
      %v985 = vsub.s32 0, %v984
      %v986 = vrot.slane %v981, %v985
      %v987 = vlaneseq
      %v988 = vshrl.u32 %v987, 7
      %v989 = vsub.s32 1, %v988
      %v990 = vrot.slane %v981, %v989
      %v993 = vmul.f32 %v973, %v986
      %v994 = vmul.f32 %v977, %v990
      %v995 = vmul.f32 %v974, %v986
      %v996 = vmul.f32 %v978, %v990
      %v997 = vmul.f32 %v975, %v986
      %v998 = vmul.f32 %v979, %v990
      %v999 = vmul.f32 %v976, %v986
      %v1000 = vmul.f32 %v980, %v990
      %1001 = vrot.lane.b32.xlu0 %v773, 113
      %v1002 = vpop.permute.xlu0 %1001
      %1003 = vrot.lane.b32.xlu0 %v775, 113
      %v1004 = vpop.permute.xlu0 %1003
      %1005 = vrot.lane.b32.xlu0 %v777, 113
      %v1006 = vpop.permute.xlu0 %1005
      %1007 = vrot.lane.b32.xlu0 %v779, 113
      %v1008 = vpop.permute.xlu0 %1007
      %1009 = vrot.lane.b32.xlu0 %v774, 113
      %v1010 = vpop.permute.xlu0 %1009
      %1011 = vrot.lane.b32.xlu0 %v776, 113
      %v1012 = vpop.permute.xlu0 %1011
      %1013 = vrot.lane.b32.xlu0 %v778, 113
      %v1014 = vpop.permute.xlu0 %1013
      %1015 = vrot.lane.b32.xlu0 %v780, 113
      %v1016 = vpop.permute.xlu0 %1015
      %v1017 = vsel %vm423, %v1002, %v1010
      %v1018 = vsel %vm423, %v1004, %v1012
      %v1019 = vsel %vm423, %v1006, %v1014
      %v1020 = vsel %vm423, %v1008, %v1016
      %v1021 = vsel %vm423, %v1010, %v1002
      %v1022 = vsel %vm423, %v1012, %v1004
      %v1023 = vsel %vm423, %v1014, %v1006
      %v1024 = vsel %vm423, %v1016, %v1008
      %v1025 = vld [vmem:[%s426] sm:$0x3]
      %v1027 = vlaneseq
      %v1028 = vshrl.u32 %v1027, 7
      %v1029 = vsub.s32 0, %v1028
      %v1030 = vrot.slane %v1025, %v1029
      %v1031 = vlaneseq
      %v1032 = vshrl.u32 %v1031, 7
      %v1033 = vsub.s32 1, %v1032
      %v1034 = vrot.slane %v1025, %v1033
      %v1037 = vmul.f32 %v1017, %v1030
      %v1038 = vmul.f32 %v1021, %v1034
      %v1039 = vmul.f32 %v1018, %v1030
      %v1040 = vmul.f32 %v1022, %v1034
      %v1041 = vmul.f32 %v1019, %v1030
      %v1042 = vmul.f32 %v1023, %v1034
      %v1043 = vmul.f32 %v1020, %v1030
      %v1044 = vmul.f32 %v1024, %v1034
      %1045 = vrot.lane.b32.xlu0 %v773, 112
      %v1046 = vpop.permute.xlu0 %1045
      %1047 = vrot.lane.b32.xlu0 %v775, 112
      %v1048 = vpop.permute.xlu0 %1047
      %1049 = vrot.lane.b32.xlu0 %v777, 112
      %v1050 = vpop.permute.xlu0 %1049
      %1051 = vrot.lane.b32.xlu0 %v779, 112
      %v1052 = vpop.permute.xlu0 %1051
      %1053 = vrot.lane.b32.xlu0 %v774, 112
      %v1054 = vpop.permute.xlu0 %1053
      %1055 = vrot.lane.b32.xlu0 %v776, 112
      %v1056 = vpop.permute.xlu0 %1055
      %1057 = vrot.lane.b32.xlu0 %v778, 112
      %v1058 = vpop.permute.xlu0 %1057
      %1059 = vrot.lane.b32.xlu0 %v780, 112
      %v1060 = vpop.permute.xlu0 %1059
      %v1061 = vsel %vm445, %v1046, %v1054
      %v1062 = vsel %vm445, %v1048, %v1056
      %v1063 = vsel %vm445, %v1050, %v1058
      %v1064 = vsel %vm445, %v1052, %v1060
      %v1065 = vsel %vm445, %v1054, %v1046
      %v1066 = vsel %vm445, %v1056, %v1048
      %v1067 = vsel %vm445, %v1058, %v1050
      %v1068 = vsel %vm445, %v1060, %v1052
      %v1069 = vld [vmem:[%s448] sm:$0x3]
      %v1071 = vlaneseq
      %v1072 = vshrl.u32 %v1071, 7
      %v1073 = vsub.s32 0, %v1072
      %v1074 = vrot.slane %v1069, %v1073
      %v1075 = vlaneseq
      %v1076 = vshrl.u32 %v1075, 7
      %v1077 = vsub.s32 1, %v1076
      %v1078 = vrot.slane %v1069, %v1077
      %v1081 = vmul.f32 %v1061, %v1074
      %v1082 = vmul.f32 %v1065, %v1078
      %v1083 = vmul.f32 %v1062, %v1074
      %v1084 = vmul.f32 %v1066, %v1078
      %v1085 = vmul.f32 %v1063, %v1074
      %v1086 = vmul.f32 %v1067, %v1078
      %v1087 = vmul.f32 %v1064, %v1074
      %v1088 = vmul.f32 %v1068, %v1078
      %1089 = vrot.lane.b32.xlu0 %v773, 111
      %v1090 = vpop.permute.xlu0 %1089
      %1091 = vrot.lane.b32.xlu0 %v775, 111
      %v1092 = vpop.permute.xlu0 %1091
      %1093 = vrot.lane.b32.xlu0 %v777, 111
      %v1094 = vpop.permute.xlu0 %1093
      %1095 = vrot.lane.b32.xlu0 %v779, 111
      %v1096 = vpop.permute.xlu0 %1095
      %1097 = vrot.lane.b32.xlu0 %v774, 111
      %v1098 = vpop.permute.xlu0 %1097
      %1099 = vrot.lane.b32.xlu0 %v776, 111
      %v1100 = vpop.permute.xlu0 %1099
      %1101 = vrot.lane.b32.xlu0 %v778, 111
      %v1102 = vpop.permute.xlu0 %1101
      %1103 = vrot.lane.b32.xlu0 %v780, 111
      %v1104 = vpop.permute.xlu0 %1103
      %v1105 = vsel %vm467, %v1090, %v1098
      %v1106 = vsel %vm467, %v1092, %v1100
      %v1107 = vsel %vm467, %v1094, %v1102
      %v1108 = vsel %vm467, %v1096, %v1104
      %v1109 = vsel %vm467, %v1098, %v1090
      %v1110 = vsel %vm467, %v1100, %v1092
      %v1111 = vsel %vm467, %v1102, %v1094
      %v1112 = vsel %vm467, %v1104, %v1096
      %v1113 = vld [vmem:[%s470] sm:$0x3]
      %v1115 = vlaneseq
      %v1116 = vshrl.u32 %v1115, 7
      %v1117 = vsub.s32 0, %v1116
      %v1118 = vrot.slane %v1113, %v1117
      %v1119 = vlaneseq
      %v1120 = vshrl.u32 %v1119, 7
      %v1121 = vsub.s32 1, %v1120
      %v1122 = vrot.slane %v1113, %v1121
      %v1125 = vmul.f32 %v1105, %v1118
      %v1126 = vmul.f32 %v1109, %v1122
      %v1127 = vmul.f32 %v1106, %v1118
      %v1128 = vmul.f32 %v1110, %v1122
      %v1129 = vmul.f32 %v1107, %v1118
      %v1130 = vmul.f32 %v1111, %v1122
      %v1131 = vmul.f32 %v1108, %v1118
      %v1132 = vmul.f32 %v1112, %v1122
      %v1133 = vld [vmem:[%s4] sm:$0xff]
      %v1134 = vld [vmem:[%s4 + $0x8] sm:$0xff]
      %v1135 = vld [vmem:[%s4 + $0x10] sm:$0xff]
      %v1136 = vld [vmem:[%s4 + $0x18] sm:$0xff]
      %v1137 = vld [vmem:[%s4 + $0x20] sm:$0xff]
      %v1138 = vld [vmem:[%s4 + $0x28] sm:$0xff]
      %v1139 = vld [vmem:[%s5] sm:$0xff]
      %v1140 = vld [vmem:[%s5 + $0x8] sm:$0xff]
      %1142 = vset.pattern.permute.xlu0 0
      %1143 = vperm.xlu0 %1142, %v1139
      %v1144 = vpop.permute.xlu0 %1143
      %1147 = vset.pattern.permute.xlu0 0
      %1148 = vperm.xlu0 %1147, %v1140
      %v1149 = vpop.permute.xlu0 %1148
      %vm1151 = vcmask 261120
      %v1153 = vsel %vm1151, %v1135, 0
      %v1156 = vsel %vm1151, %v1138, 0
      %1158 = vmatprep.subr.mxu0 %v818
      %1159 = vmatpush1.msra.mxu0 %v817
      %1160 = vmatprep.subr.mxu0 %v820
      %1161 = vmatpush1.msra.mxu0 %v819
      %1162 = vmatprep.subr.mxu0 %v822
      %1163 = vmatpush1.msra.mxu0 %v821
      %1164 = vmatprep.subr.mxu0 %v824
      %1165 = vmatpush1.msra.mxu0 %v823
      %1166 = vmatprep.subr.mxu0 %v862
      %1167 = vmatpush1.msra.mxu0 %v861
      %1168 = vmatprep.subr.mxu0 %v864
      %1169 = vmatpush1.msra.mxu0 %v863
      %1170 = vmatprep.subr.mxu0 %v866
      %1171 = vmatpush1.msra.mxu0 %v865
      %1172 = vmatprep.subr.mxu0 %v868
      %1173 = vmatpush1.msra.mxu0 %v867
      %1174 = vmatprep.subr.mxu0 %v906
      %1175 = vmatpush1.msra.mxu0 %v905
      %1176 = vmatprep.subr.mxu0 %v908
      %1177 = vmatpush1.msra.mxu0 %v907
      %1178 = vmatprep.subr.mxu0 %v910
      %1179 = vmatpush1.msra.mxu0 %v909
      %1180 = vmatprep.subr.mxu0 %v912
      %1181 = vmatpush1.msra.mxu0 %v911
      %1182 = vmatprep.subr.mxu0 %v950
      %1183 = vmatpush1.msra.mxu0 %v949
      %1184 = vmatprep.subr.mxu0 %v952
      %1185 = vmatpush1.msra.mxu0 %v951
      %1186 = vmatprep.subr.mxu0 %v954
      %1187 = vmatpush1.msra.mxu0 %v953
      %1188 = vmatprep.subr.mxu0 %v956
      %1189 = vmatpush1.msra.mxu0 %v955
      %1190 = vmatprep.subr.mxu0 %v774
      %1191 = vmatpush1.msra.mxu0 %v773
      %1192 = vmatprep.subr.mxu0 %v776
      %1193 = vmatpush1.msra.mxu0 %v775
      %1194 = vmatprep.subr.mxu0 %v778
      %1195 = vmatpush1.msra.mxu0 %v777
      %1196 = vmatprep.subr.mxu0 %v780
      %1197 = vmatpush1.msra.mxu0 %v779
      %1198 = vmatprep.subr.mxu0 %v994
      %1199 = vmatpush1.msra.mxu0 %v993
      %1200 = vmatprep.subr.mxu0 %v996
      %1201 = vmatpush1.msra.mxu0 %v995
      %1202 = vmatprep.subr.mxu0 %v998
      %1203 = vmatpush1.msra.mxu0 %v997
      %1204 = vmatprep.subr.mxu0 %v1000
      %1205 = vmatpush1.msra.mxu0 %v999
      %1206 = vmatprep.subr.mxu0 %v1038
      %1207 = vmatpush1.msra.mxu0 %v1037
      %1208 = vmatprep.subr.mxu0 %v1040
      %1209 = vmatpush1.msra.mxu0 %v1039
      %1210 = vmatprep.subr.mxu0 %v1042
      %1211 = vmatpush1.msra.mxu0 %v1041
      %1212 = vmatprep.subr.mxu0 %v1044
      %1213 = vmatpush1.msra.mxu0 %v1043
      %1214 = vmatprep.subr.mxu0 %v1082
      %1215 = vmatpush1.msra.mxu0 %v1081
      %1216 = vmatprep.subr.mxu0 %v1084
      %1217 = vmatpush1.msra.mxu0 %v1083
      %1218 = vmatprep.subr.mxu0 %v1086
      %1219 = vmatpush1.msra.mxu0 %v1085
      %1220 = vmatprep.subr.mxu0 %v1088
      %1221 = vmatpush1.msra.mxu0 %v1087
      %1222 = vmatprep.mubr.f32.mxu0 %v1134
      %1223 = vmatmul.mubr.f32.gmra.mrb[0].mxu0 %v1133
      %v1224 = vpop.f32.mrb[0].mxu0
      %v1225 = vadd.f32 %v1144, %v1224
      %v1226 = vpop.f32.mrb[0].mxu0
      %v1227 = vadd.f32 %v1144, %v1226
      %1228 = vmatprep.mubr.f32.mxu0 %v1137
      %1229 = vmatmul.mubr.f32.gmra.mrb[0].mxu0 %v1136
      %v1230 = vpop.f32.mrb[0].mxu0
      %v1231 = vadd.f32 %v1149, %v1230
      %v1232 = vpop.f32.mrb[0].mxu0
      %v1233 = vadd.f32 %v1149, %v1232
      %1234 = vdwg.mxu0
      %1235 = vmatprep.subr.mxu0 %v1126
      %1236 = vmatpush1.msra.mxu0 %v1125
      %1237 = vmatprep.subr.mxu0 %v1128
      %1238 = vmatpush1.msra.mxu0 %v1127
      %1239 = vmatprep.subr.mxu0 %v1130
      %1240 = vmatpush1.msra.mxu0 %v1129
      %1241 = vmatprep.subr.mxu0 %v1132
      %1242 = vmatpush1.msra.mxu0 %v1131
      %1243 = vmatprep.subr.mxu0 0.0
      %1244 = vmatpush1.msra.mxu0 0.0
      %1245 = vmatprep.subr.mxu0 0.0
      %1246 = vmatpush1.msra.mxu0 0.0
      %1247 = vmatprep.subr.mxu0 0.0
      %1248 = vmatpush1.msra.mxu0 0.0
      %1249 = vmatprep.subr.mxu0 0.0
      %1250 = vmatpush1.msra.mxu0 0.0
      %1251 = vmatprep.subr.mxu0 0.0
      %1252 = vmatpush1.msra.mxu0 0.0
      %1253 = vmatprep.subr.mxu0 0.0
      %1254 = vmatpush1.msra.mxu0 0.0
      %1255 = vmatprep.subr.mxu0 0.0
      %1256 = vmatpush1.msra.mxu0 0.0
      %1257 = vmatprep.subr.mxu0 0.0
      %1258 = vmatpush1.msra.mxu0 0.0
      %1259 = vmatprep.subr.mxu0 0.0
      %1260 = vmatpush1.msra.mxu0 0.0
      %1261 = vmatprep.subr.mxu0 0.0
      %1262 = vmatpush1.msra.mxu0 0.0
      %1263 = vmatprep.subr.mxu0 0.0
      %1264 = vmatpush1.msra.mxu0 0.0
      %1265 = vmatprep.subr.mxu0 0.0
      %1266 = vmatpush1.msra.mxu0 0.0
      %1267 = vmatprep.subr.mxu0 0.0
      %1268 = vmatpush1.msra.mxu0 0.0
      %1269 = vmatprep.subr.mxu0 0.0
      %1270 = vmatpush1.msra.mxu0 0.0
      %1271 = vmatprep.subr.mxu0 0.0
      %1272 = vmatpush1.msra.mxu0 0.0
      %1273 = vmatprep.subr.mxu0 0.0
      %1274 = vmatpush1.msra.mxu0 0.0
      %1275 = vmatprep.subr.mxu0 0.0
      %1276 = vmatpush1.msra.mxu0 0.0
      %1277 = vmatprep.subr.mxu0 0.0
      %1278 = vmatpush1.msra.mxu0 0.0
      %1279 = vmatprep.subr.mxu0 0.0
      %1280 = vmatpush1.msra.mxu0 0.0
      %1281 = vmatprep.subr.mxu0 0.0
      %1282 = vmatpush1.msra.mxu0 0.0
      %1283 = vmatprep.subr.mxu0 0.0
      %1284 = vmatpush1.msra.mxu0 0.0
      %1285 = vmatprep.subr.mxu0 0.0
      %1286 = vmatpush1.msra.mxu0 0.0
      %1287 = vmatprep.subr.mxu0 0.0
      %1288 = vmatpush1.msra.mxu0 0.0
      %1289 = vmatprep.subr.mxu0 0.0
      %1290 = vmatpush1.msra.mxu0 0.0
      %1291 = vmatprep.subr.mxu0 0.0
      %1292 = vmatpush1.msra.mxu0 0.0
      %1293 = vmatprep.subr.mxu0 0.0
      %1294 = vmatpush1.msra.mxu0 0.0
      %1295 = vmatprep.subr.mxu0 0.0
      %1296 = vmatpush1.msra.mxu0 0.0
      %1297 = vmatprep.subr.mxu0 0.0
      %1298 = vmatpush1.msra.mxu0 0.0
      %1299 = vmatprep.mubr.f32.mxu0 0.0
      %1300 = vmatmul.mubr.f32.gmra.mrb[0].mxu0 %v1153
      %v1301 = vpop.f32.mrb[0].mxu0
      %v1302 = vadd.f32 %v1225, %v1301
      %v1303 = vpop.f32.mrb[0].mxu0
      %v1304 = vadd.f32 %v1227, %v1303
      %1305 = vmatprep.mubr.f32.mxu0 0.0
      %1306 = vmatmul.mubr.f32.gmra.mrb[0].mxu0 %v1156
      %v1307 = vpop.f32.mrb[0].mxu0
      %v1308 = vadd.f32 %v1231, %v1307
      %v1309 = vpop.f32.mrb[0].mxu0
      %v1310 = vadd.f32 %v1233, %v1309
      %1311 = vdwg.mxu0
      %vm1312 = vcmp.ge.f32.partialorder %v1302, 0.0
      %vm1313 = vcmp.ge.f32.partialorder %v1304, 0.0
      %vm1314 = vcmp.ge.f32.partialorder %v1308, 0.0
      %vm1315 = vcmp.ge.f32.partialorder %v1310, 0.0
      %v1316 = vmul.f32 %v1302, 0.01
      %v1317 = vmul.f32 %v1304, 0.01
      %v1318 = vmul.f32 %v1308, 0.01
      %v1319 = vmul.f32 %v1310, 0.01
      %v1320 = vsel %vm1312, %v1302, %v1316
      %v1321 = vsel %vm1313, %v1304, %v1317
      %v1322 = vsel %vm1314, %v1308, %v1318
      %v1323 = vsel %vm1315, %v1310, %v1319
      %v1324 = vadd.f32 %v1320, %v1321
      %v1325 = vadd.f32 %v1324, %v1322
      %v1326 = vadd.f32 %v1325, %v1323
      %1327 = vadd.xlane.f32.xlu0 %v1326
      %v1328 = vpop.xlane.xlu0 %1327
      %v1329 = vrot.slane %v1328, 4
      %v1330 = vadd.f32 %v1328, %v1329
      %v1331 = vrot.slane %v1330, 2
      %v1332 = vadd.f32 %v1330, %v1331
      %v1333 = vrot.slane %v1332, 1
      %v1334 = vadd.f32 %v1332, %v1333
      %s1335 = vtos %v1334
      %v1336 = vmul.f32 %v1320, %v1320
      %v1337 = vmul.f32 %v1321, %v1321
      %v1338 = vmul.f32 %v1322, %v1322
      %v1339 = vmul.f32 %v1323, %v1323
      %v1340 = vadd.f32 %v1336, %v1337
      %v1341 = vadd.f32 %v1340, %v1338
      %v1342 = vadd.f32 %v1341, %v1339
      %1343 = vadd.xlane.f32.xlu0 %v1342
      %v1344 = vpop.xlane.xlu0 %1343
      %v1345 = vrot.slane %v1344, 4
      %v1346 = vadd.f32 %v1344, %v1345
      %v1347 = vrot.slane %v1346, 2
      %v1348 = vadd.f32 %v1346, %v1347
      %v1349 = vrot.slane %v1348, 1
      %v1350 = vadd.f32 %v1348, %v1349
      %s1351 = vtos %v1350
      %v1352 = vrcp.pop 4096.0
      %s1353 = vtos %v1352
      %s1354 = smul.f32 %s1335, %s1353
      %v1355 = vrcp.pop 4096.0
      %s1356 = vtos %v1355
      %s1357 = smul.f32 %s1351, %s1356
      %s1358 = smul.f32 %s1354, %s1354
      %s1359 = ssub.f32 %s1357, %s1358
      %v1360 = vstv %s1354
      %v1361 = vsub.f32 %v1320, %v1360
      %v1362 = vsub.f32 %v1321, %v1360
      %v1363 = vsub.f32 %v1322, %v1360
      %v1364 = vsub.f32 %v1323, %v1360
      %s1365 = sadd.f32 %s1359, 1e-05
      %v1366 = vstv %s1365
      %v1367 = vrsqrt.pop %v1366
      %s1368 = vtos %v1367
      %v1369 = vstv %s1368
      %v1370 = vmul.f32 %v1361, %v1369
      %v1371 = vmul.f32 %v1362, %v1369
      %v1372 = vmul.f32 %v1363, %v1369
      %v1373 = vmul.f32 %v1364, %v1369
      %1374 = vrot.lane.b32.xlu0 %v1370, 17
      %v1375 = vpop.permute.xlu0 %1374
      %1376 = vrot.lane.b32.xlu0 %v1372, 17
      %v1377 = vpop.permute.xlu0 %1376
      %1378 = vrot.lane.b32.xlu0 %v1371, 17
      %v1379 = vpop.permute.xlu0 %1378
      %1380 = vrot.lane.b32.xlu0 %v1373, 17
      %v1381 = vpop.permute.xlu0 %1380
      %v1382 = vsel %vm314, %v1375, %v1379
      %v1383 = vsel %vm314, %v1377, %v1381
      %v1384 = vsel %vm314, %v1379, %v1375
      %v1385 = vsel %vm314, %v1381, %v1377
      %v1386 = vmul.f32 %v1384, %v810
      %v1387 = vmul.f32 %v1382, %v814
      %v1388 = vmul.f32 %v1385, %v810
      %v1389 = vmul.f32 %v1383, %v814
      %1390 = vrot.lane.b32.xlu0 %v1370, 16
      %v1391 = vpop.permute.xlu0 %1390
      %1392 = vrot.lane.b32.xlu0 %v1372, 16
      %v1393 = vpop.permute.xlu0 %1392
      %1394 = vrot.lane.b32.xlu0 %v1371, 16
      %v1395 = vpop.permute.xlu0 %1394
      %1396 = vrot.lane.b32.xlu0 %v1373, 16
      %v1397 = vpop.permute.xlu0 %1396
      %v1398 = vsel %vm335, %v1391, %v1395
      %v1399 = vsel %vm335, %v1393, %v1397
      %v1400 = vsel %vm335, %v1395, %v1391
      %v1401 = vsel %vm335, %v1397, %v1393
      %v1402 = vmul.f32 %v1400, %v854
      %v1403 = vmul.f32 %v1398, %v858
      %v1404 = vmul.f32 %v1401, %v854
      %v1405 = vmul.f32 %v1399, %v858
      %1406 = vrot.lane.b32.xlu0 %v1370, 15
      %v1407 = vpop.permute.xlu0 %1406
      %1408 = vrot.lane.b32.xlu0 %v1372, 15
      %v1409 = vpop.permute.xlu0 %1408
      %1410 = vrot.lane.b32.xlu0 %v1371, 15
      %v1411 = vpop.permute.xlu0 %1410
      %1412 = vrot.lane.b32.xlu0 %v1373, 15
      %v1413 = vpop.permute.xlu0 %1412
      %v1414 = vsel %vm357, %v1407, %v1411
      %v1415 = vsel %vm357, %v1409, %v1413
      %v1416 = vsel %vm357, %v1411, %v1407
      %v1417 = vsel %vm357, %v1413, %v1409
      %v1418 = vmul.f32 %v1416, %v898
      %v1419 = vmul.f32 %v1414, %v902
      %v1420 = vmul.f32 %v1417, %v898
      %v1421 = vmul.f32 %v1415, %v902
      %1422 = vrot.lane.b32.xlu0 %v1370, 1
      %v1423 = vpop.permute.xlu0 %1422
      %1424 = vrot.lane.b32.xlu0 %v1372, 1
      %v1425 = vpop.permute.xlu0 %1424
      %1426 = vrot.lane.b32.xlu0 %v1371, 1
      %v1427 = vpop.permute.xlu0 %1426
      %1428 = vrot.lane.b32.xlu0 %v1373, 1
      %v1429 = vpop.permute.xlu0 %1428
      %v1430 = vsel %vm379, %v1423, %v1427
      %v1431 = vsel %vm379, %v1425, %v1429
      %v1432 = vsel %vm379, %v1427, %v1423
      %v1433 = vsel %vm379, %v1429, %v1425
      %v1434 = vmul.f32 %v1432, %v942
      %v1435 = vmul.f32 %v1430, %v946
      %v1436 = vmul.f32 %v1433, %v942
      %v1437 = vmul.f32 %v1431, %v946
      %1438 = vrot.lane.b32.xlu0 %v1370, 127
      %v1439 = vpop.permute.xlu0 %1438
      %1440 = vrot.lane.b32.xlu0 %v1372, 127
      %v1441 = vpop.permute.xlu0 %1440
      %1442 = vrot.lane.b32.xlu0 %v1371, 127
      %v1443 = vpop.permute.xlu0 %1442
      %1444 = vrot.lane.b32.xlu0 %v1373, 127
      %v1445 = vpop.permute.xlu0 %1444
      %v1446 = vsel %vm401, %v1439, %v1443
      %v1447 = vsel %vm401, %v1441, %v1445
      %v1448 = vsel %vm401, %v1443, %v1439
      %v1449 = vsel %vm401, %v1445, %v1441
      %v1450 = vmul.f32 %v1446, %v986
      %v1451 = vmul.f32 %v1448, %v990
      %v1452 = vmul.f32 %v1447, %v986
      %v1453 = vmul.f32 %v1449, %v990
      %1454 = vrot.lane.b32.xlu0 %v1370, 113
      %v1455 = vpop.permute.xlu0 %1454
      %1456 = vrot.lane.b32.xlu0 %v1372, 113
      %v1457 = vpop.permute.xlu0 %1456
      %1458 = vrot.lane.b32.xlu0 %v1371, 113
      %v1459 = vpop.permute.xlu0 %1458
      %1460 = vrot.lane.b32.xlu0 %v1373, 113
      %v1461 = vpop.permute.xlu0 %1460
      %v1462 = vsel %vm423, %v1455, %v1459
      %v1463 = vsel %vm423, %v1457, %v1461
      %v1464 = vsel %vm423, %v1459, %v1455
      %v1465 = vsel %vm423, %v1461, %v1457
      %v1466 = vmul.f32 %v1462, %v1030
      %v1467 = vmul.f32 %v1464, %v1034
      %v1468 = vmul.f32 %v1463, %v1030
      %v1469 = vmul.f32 %v1465, %v1034
      %1470 = vrot.lane.b32.xlu0 %v1370, 112
      %v1471 = vpop.permute.xlu0 %1470
      %1472 = vrot.lane.b32.xlu0 %v1372, 112
      %v1473 = vpop.permute.xlu0 %1472
      %1474 = vrot.lane.b32.xlu0 %v1371, 112
      %v1475 = vpop.permute.xlu0 %1474
      %1476 = vrot.lane.b32.xlu0 %v1373, 112
      %v1477 = vpop.permute.xlu0 %1476
      %v1478 = vsel %vm445, %v1471, %v1475
      %v1479 = vsel %vm445, %v1473, %v1477
      %v1480 = vsel %vm445, %v1475, %v1471
      %v1481 = vsel %vm445, %v1477, %v1473
      %v1482 = vmul.f32 %v1478, %v1074
      %v1483 = vmul.f32 %v1480, %v1078
      %v1484 = vmul.f32 %v1479, %v1074
      %v1485 = vmul.f32 %v1481, %v1078
      %1486 = vrot.lane.b32.xlu0 %v1370, 111
      %v1487 = vpop.permute.xlu0 %1486
      %1488 = vrot.lane.b32.xlu0 %v1372, 111
      %v1489 = vpop.permute.xlu0 %1488
      %1490 = vrot.lane.b32.xlu0 %v1371, 111
      %v1491 = vpop.permute.xlu0 %1490
      %1492 = vrot.lane.b32.xlu0 %v1373, 111
      %v1493 = vpop.permute.xlu0 %1492
      %v1494 = vsel %vm467, %v1487, %v1491
      %v1495 = vsel %vm467, %v1489, %v1493
      %v1496 = vsel %vm467, %v1491, %v1487
      %v1497 = vsel %vm467, %v1493, %v1489
      %v1498 = vmul.f32 %v1494, %v1118
      %v1499 = vmul.f32 %v1496, %v1122
      %v1500 = vmul.f32 %v1495, %v1118
      %v1501 = vmul.f32 %v1497, %v1122
      %v1502 = vld [vmem:[%s6] sm:$0xff]
      %v1503 = vld [vmem:[%s6 + $0x8] sm:$0xff]
      %v1504 = vld [vmem:[%s6 + $0x10] sm:$0xff]
      %v1505 = vld [vmem:[%s6 + $0x18] sm:$0xff]
      %v1506 = vld [vmem:[%s6 + $0x20] sm:$0xff]
      %v1507 = vld [vmem:[%s6 + $0x28] sm:$0xff]
      %v1508 = vld [vmem:[%s6 + $0x30] sm:$0xff]
      %v1509 = vld [vmem:[%s6 + $0x38] sm:$0xff]
      %v1510 = vld [vmem:[%s7] sm:$0xff]
      %v1511 = vld [vmem:[%s7 + $0x8] sm:$0xff]
      %v1512 = vld [vmem:[%s7 + $0x10] sm:$0xff]
      %v1513 = vld [vmem:[%s7 + $0x18] sm:$0xff]
      %1515 = vset.pattern.permute.xlu0 0
      %1516 = vperm.xlu0 %1515, %v1510
      %v1517 = vpop.permute.xlu0 %1516
      %1520 = vset.pattern.permute.xlu0 0
      %1521 = vperm.xlu0 %1520, %v1511
      %v1522 = vpop.permute.xlu0 %1521
      %1525 = vset.pattern.permute.xlu0 0
      %1526 = vperm.xlu0 %1525, %v1512
      %v1527 = vpop.permute.xlu0 %1526
      %1530 = vset.pattern.permute.xlu0 0
      %1531 = vperm.xlu0 %1530, %v1513
      %v1532 = vpop.permute.xlu0 %1531
      %vm1534 = vcmask 130048
      %v1536 = vsel %vm1534, %v1503, 0
      %v1539 = vsel %vm1534, %v1505, 0
      %v1542 = vsel %vm1534, %v1507, 0
      %v1545 = vsel %vm1534, %v1509, 0
      %1547 = vmatprep.subr.mxu0 %v1387
      %1548 = vmatpush1.msra.mxu0 %v1386
      %1549 = vmatprep.subr.mxu0 %v1389
      %1550 = vmatpush1.msra.mxu0 %v1388
      %1551 = vmatprep.subr.mxu0 %v1403
      %1552 = vmatpush1.msra.mxu0 %v1402
      %1553 = vmatprep.subr.mxu0 %v1405
      %1554 = vmatpush1.msra.mxu0 %v1404
      %1555 = vmatprep.subr.mxu0 %v1419
      %1556 = vmatpush1.msra.mxu0 %v1418
      %1557 = vmatprep.subr.mxu0 %v1421
      %1558 = vmatpush1.msra.mxu0 %v1420
      %1559 = vmatprep.subr.mxu0 %v1435
      %1560 = vmatpush1.msra.mxu0 %v1434
      %1561 = vmatprep.subr.mxu0 %v1437
      %1562 = vmatpush1.msra.mxu0 %v1436
      %1563 = vmatprep.subr.mxu0 %v1371
      %1564 = vmatpush1.msra.mxu0 %v1370
      %1565 = vmatprep.subr.mxu0 %v1373
      %1566 = vmatpush1.msra.mxu0 %v1372
      %1567 = vmatprep.subr.mxu0 %v1451
      %1568 = vmatpush1.msra.mxu0 %v1450
      %1569 = vmatprep.subr.mxu0 %v1453
      %1570 = vmatpush1.msra.mxu0 %v1452
      %1571 = vmatprep.subr.mxu0 %v1467
      %1572 = vmatpush1.msra.mxu0 %v1466
      %1573 = vmatprep.subr.mxu0 %v1469
      %1574 = vmatpush1.msra.mxu0 %v1468
      %1575 = vmatprep.subr.mxu0 %v1483
      %1576 = vmatpush1.msra.mxu0 %v1482
      %1577 = vmatprep.subr.mxu0 %v1485
      %1578 = vmatpush1.msra.mxu0 %v1484
      %1579 = vmatprep.subr.mxu0 %v1499
      %1580 = vmatpush1.msra.mxu0 %v1498
      %1581 = vmatprep.subr.mxu0 %v1501
      %1582 = vmatpush1.msra.mxu0 %v1500
      %1583 = vmatprep.subr.mxu0 0.0
      %1584 = vmatpush1.msra.mxu0 0.0
      %1585 = vmatprep.subr.mxu0 0.0
      %1586 = vmatpush1.msra.mxu0 0.0
      %1587 = vmatprep.subr.mxu0 0.0
      %1588 = vmatpush1.msra.mxu0 0.0
      %1589 = vmatprep.subr.mxu0 0.0
      %1590 = vmatpush1.msra.mxu0 0.0
      %1591 = vmatprep.subr.mxu0 0.0
      %1592 = vmatpush1.msra.mxu0 0.0
      %1593 = vmatprep.subr.mxu0 0.0
      %1594 = vmatpush1.msra.mxu0 0.0
      %1595 = vmatprep.subr.mxu0 0.0
      %1596 = vmatpush1.msra.mxu0 0.0
      %1597 = vmatprep.subr.mxu0 0.0
      %1598 = vmatpush1.msra.mxu0 0.0
      %1599 = vmatprep.subr.mxu0 0.0
      %1600 = vmatpush1.msra.mxu0 0.0
      %1601 = vmatprep.subr.mxu0 0.0
      %1602 = vmatpush1.msra.mxu0 0.0
      %1603 = vmatprep.subr.mxu0 0.0
      %1604 = vmatpush1.msra.mxu0 0.0
      %1605 = vmatprep.subr.mxu0 0.0
      %1606 = vmatpush1.msra.mxu0 0.0
      %1607 = vmatprep.subr.mxu0 0.0
      %1608 = vmatpush1.msra.mxu0 0.0
      %1609 = vmatprep.subr.mxu0 0.0
      %1610 = vmatpush1.msra.mxu0 0.0
      %1611 = vmatprep.mubr.f32.mxu0 %v1536
      %1612 = vmatmul.mubr.f32.gmra.mrb[0].mxu0 %v1502
      %v1613 = vpop.f32.mrb[0].mxu0
      %v1614 = vadd.f32 %v1517, %v1613
      %v1615 = vpop.f32.mrb[0].mxu0
      %v1616 = vadd.f32 %v1517, %v1615
      %1617 = vmatprep.mubr.f32.mxu0 %v1539
      %1618 = vmatmul.mubr.f32.gmra.mrb[0].mxu0 %v1504
      %v1619 = vpop.f32.mrb[0].mxu0
      %v1620 = vadd.f32 %v1522, %v1619
      %v1621 = vpop.f32.mrb[0].mxu0
      %v1622 = vadd.f32 %v1522, %v1621
      %1623 = vmatprep.mubr.f32.mxu0 %v1542
      %1624 = vmatmul.mubr.f32.gmra.mrb[0].mxu0 %v1506
      %v1625 = vpop.f32.mrb[0].mxu0
      %v1626 = vadd.f32 %v1527, %v1625
      %v1627 = vpop.f32.mrb[0].mxu0
      %v1628 = vadd.f32 %v1527, %v1627
      %1629 = vmatprep.mubr.f32.mxu0 %v1545
      %1630 = vmatmul.mubr.f32.gmra.mrb[0].mxu0 %v1508
      %v1631 = vpop.f32.mrb[0].mxu0
      %v1632 = vadd.f32 %v1532, %v1631
      %v1633 = vpop.f32.mrb[0].mxu0
      %v1634 = vadd.f32 %v1532, %v1633
      %1635 = vdwg.mxu0
      %vm1636 = vcmp.ge.f32.partialorder %v1614, 0.0
      %vm1637 = vcmp.ge.f32.partialorder %v1616, 0.0
      %vm1638 = vcmp.ge.f32.partialorder %v1620, 0.0
      %vm1639 = vcmp.ge.f32.partialorder %v1622, 0.0
      %vm1640 = vcmp.ge.f32.partialorder %v1626, 0.0
      %vm1641 = vcmp.ge.f32.partialorder %v1628, 0.0
      %vm1642 = vcmp.ge.f32.partialorder %v1632, 0.0
      %vm1643 = vcmp.ge.f32.partialorder %v1634, 0.0
      %v1644 = vmul.f32 %v1614, 0.01
      %v1645 = vmul.f32 %v1616, 0.01
      %v1646 = vmul.f32 %v1620, 0.01
      %v1647 = vmul.f32 %v1622, 0.01
      %v1648 = vmul.f32 %v1626, 0.01
      %v1649 = vmul.f32 %v1628, 0.01
      %v1650 = vmul.f32 %v1632, 0.01
      %v1651 = vmul.f32 %v1634, 0.01
      %v1652 = vsel %vm1636, %v1614, %v1644
      %v1653 = vsel %vm1637, %v1616, %v1645
      %v1654 = vsel %vm1638, %v1620, %v1646
      %v1655 = vsel %vm1639, %v1622, %v1647
      %v1656 = vsel %vm1640, %v1626, %v1648
      %v1657 = vsel %vm1641, %v1628, %v1649
      %v1658 = vsel %vm1642, %v1632, %v1650
      %v1659 = vsel %vm1643, %v1634, %v1651
      %v1660 = vld [vmem:[#allocation2] sm:$0xff]
      %v1661 = vld [vmem:[#allocation2 + $0x8] sm:$0xff]
      %v1662 = vld [vmem:[#allocation2 + $0x10] sm:$0xff]
      %v1663 = vld [vmem:[#allocation2 + $0x18] sm:$0xff]
      %v1664 = vld [vmem:[#allocation2 + $0x20] sm:$0xff]
      %v1665 = vld [vmem:[#allocation2 + $0x28] sm:$0xff]
      %v1666 = vld [vmem:[#allocation2 + $0x30] sm:$0xff]
      %v1667 = vld [vmem:[#allocation2 + $0x38] sm:$0xff]
      %v1668 = vadd.f32 %v1652, %v1660
      %v1669 = vadd.f32 %v1653, %v1661
      %v1670 = vadd.f32 %v1654, %v1662
      %v1671 = vadd.f32 %v1655, %v1663
      %v1672 = vadd.f32 %v1656, %v1664
      %v1673 = vadd.f32 %v1657, %v1665
      %v1674 = vadd.f32 %v1658, %v1666
      %v1675 = vadd.f32 %v1659, %v1667
      %vm1676 = vcmp.ge.f32.partialorder %v1668, 0.0
      %vm1677 = vcmp.ge.f32.partialorder %v1669, 0.0
      %vm1678 = vcmp.ge.f32.partialorder %v1670, 0.0
      %vm1679 = vcmp.ge.f32.partialorder %v1671, 0.0
      %vm1680 = vcmp.ge.f32.partialorder %v1672, 0.0
      %vm1681 = vcmp.ge.f32.partialorder %v1673, 0.0
      %vm1682 = vcmp.ge.f32.partialorder %v1674, 0.0
      %vm1683 = vcmp.ge.f32.partialorder %v1675, 0.0
      %v1684 = vmul.f32 %v1668, 0.01
      %v1685 = vmul.f32 %v1669, 0.01
      %v1686 = vmul.f32 %v1670, 0.01
      %v1687 = vmul.f32 %v1671, 0.01
      %v1688 = vmul.f32 %v1672, 0.01
      %v1689 = vmul.f32 %v1673, 0.01
      %v1690 = vmul.f32 %v1674, 0.01
      %v1691 = vmul.f32 %v1675, 0.01
      %v1692 = vsel %vm1676, %v1668, %v1684
      %v1693 = vsel %vm1677, %v1669, %v1685
      %v1694 = vsel %vm1678, %v1670, %v1686
      %v1695 = vsel %vm1679, %v1671, %v1687
      %v1696 = vsel %vm1680, %v1672, %v1688
      %v1697 = vsel %vm1681, %v1673, %v1689
      %v1698 = vsel %vm1682, %v1674, %v1690
      %v1699 = vsel %vm1683, %v1675, %v1691
      %1700 = vst [vmem:[%s305] sm:$0xff] %v1692
      %1701 = vst [vmem:[%s305 + $0x8] sm:$0xff] %v1693
      %1702 = vst [vmem:[%s305 + $0x10] sm:$0xff] %v1694
      %1703 = vst [vmem:[%s305 + $0x18] sm:$0xff] %v1695
      %1704 = vst [vmem:[%s305 + $0x20] sm:$0xff] %v1696
      %1705 = vst [vmem:[%s305 + $0x28] sm:$0xff] %v1697
      %1706 = vst [vmem:[%s305 + $0x30] sm:$0xff] %v1698
      %1707 = vst [vmem:[%s305 + $0x38] sm:$0xff] %v1699
      %p1708 = scmp.lt.s32.totalorder %s19, 1
      %s1709 = scalar_select %p1708, %s19, 1
      %s1710 = smul.addr %s1709, 8
      %s1711 = smul.addr %s1710, 8
      %s1712 = scalar_lea.vmem %s8, %s1711
      // Predicated region
      $region53: #{_lambda_.1} parent=51 // pred_check
        %p1713 = pneg %p210
      $region54: #{_lambda_.1} parent=51 // pred_check_branch
        %1715 = sbr.rel (%p1713) target = $region56
      $region55: #{_lambda_.1} parent=51 // pred_region
        _
      $region56: #{_lambda_.1} parent=51 // pred_fallthru
        _
    $region52: #{_lambda_.1} parent=5 // pred_fallthru
      _
    %p1716 = scmp.le.s32.totalorder 2, %s14
    // Predicated region
    $region57: #{_lambda_.1} parent=5 // pred_check
      %p1717 = pneg %p1716
    $region58: #{_lambda_.1} parent=5 // pred_check_branch
      %1719 = sbr.rel (%p1717) target = $region60
    $region59: #{_lambda_.1} parent=5 // pred_region
      %s1720 = ssub.s32 %s14, 2
      // Predicated region
      $region61: #{_lambda_.1} parent=59 // pred_check
        %p1721 = pneg %p216
      $region62: #{_lambda_.1} parent=59 // pred_check_branch
        %1723 = sbr.rel (%p1721) target = $region64
      $region63: #{_lambda_.1} parent=59 // pred_region
        %p1724 = scmp.lt.s32.totalorder %s20, 1
        %s1725 = scalar_select %p1724, %s20, 1
        %s1726 = smul.addr %s1725, 8
        %s1727 = smul.addr %s1726, 8
        %s1728 = scalar_lea.vmem %s8, %s1727
      $region64: #{_lambda_.1} parent=59 // pred_fallthru
        _
    $region60: #{_lambda_.1} parent=5 // pred_fallthru
      _
  $region6: #{_lambda_.1} parent=0 // loop_footer
    %s18 = sadd.s32 1, %s14
  $region7: #{_lambda_.1} parent=0 // loop_footer_branch
    %13 = sbr.rel target = $region3
  $region8: #{_lambda_.1} parent=0 // loop_exit
    _

</llo_original>
